<compile_context>
chip_gen: v7x
topology: tpu7x:2x2x1
jax: 0.10.0
libtpu: 0.0.40
codegen_flags: <defaults>
</compile_context>

<pallas_src>
import jax
import jax.numpy as jnp
from jax.experimental import pallas as pl
from jax.experimental.pallas import tpu as pltpu


def _round_up(v, m):
    return ((v + m - 1) // m) * m


# ----------------------------------------------------------------------------
# Plain-JAX glue: dense scaled-Laplacian propagation matrix exactly as PyG
# ChebConv builds it (sym normalization, lambda_max = 2.0, no self-loops in
# the input edge list).  Built TRANSPOSED directly (scatter at [dst, src]) so
# no explicit transpose pass is needed, at padded size, in the requested dtype.
# ----------------------------------------------------------------------------
def build_cheb_propagation_matrix(edge_index, edge_weight, num_nodes,
                                  pad_to=None, out_dtype=jnp.float32):
    size = num_nodes if pad_to is None else pad_to
    src, dst = edge_index[0], edge_index[1]
    at = jnp.zeros((size, size), jnp.float32).at[dst, src].add(edge_weight)
    deg = at.sum(axis=0)                              # degree over source index
    dis = jnp.where(deg > 0, jax.lax.rsqrt(deg), 0.0)
    # L_hat[i, j] = -deg(j)^-1/2 * A[j, i] * deg(i)^-1/2
    return (-(dis[:, None] * at * dis[None, :])).astype(out_dtype)


# ----------------------------------------------------------------------------
# Pallas kernel: tiled ChebConv(K=2) + bias + LeakyReLU
#   grid = (npad // tm, npad // tk)   [row tiles, contraction tiles]
#   scalar prefetch: fetch_i, fetch_k (L_hat DMA redirect), flags (tile nnz)
# ----------------------------------------------------------------------------
def gcn_unit_kernel(fi_ref, fk_ref, fl_ref, lhat_ref, x_ref, w_ref, b_ref,
                    o_ref, acc_ref):
    del fi_ref, fk_ref                      # only used inside index_maps
    i = pl.program_id(0)
    k = pl.program_id(1)
    nk = pl.num_programs(1)
    tm, tk = lhat_ref.shape
    fp_in = x_ref.shape[1]

    @pl.when(k == 0)
    def _():
        acc_ref[...] = jnp.zeros_like(acc_ref)

    # Accumulate Tx1 tile only if this (i, k) L_hat tile has any nonzero entry.
    @pl.when(fl_ref[i * nk + k] != 0)
    def _():
        xk = x_ref[pl.ds(pl.multiple_of(k * tk, tk), tk), :]      # (tk, Fp_in)
        acc_ref[...] += jnp.dot(lhat_ref[...], xk,
                                preferred_element_type=jnp.float32)

    @pl.when(k == nk - 1)
    def _():
        tx0 = x_ref[pl.ds(pl.multiple_of(i * tm, tm), tm), :]     # bf16
        tx1 = acc_ref[...].astype(jnp.bfloat16)                   # bf16
        out = jnp.dot(tx0, w_ref[pl.ds(0, fp_in), :],
                      preferred_element_type=jnp.float32)
        out = out + jnp.dot(tx1, w_ref[pl.ds(fp_in, fp_in), :],
                            preferred_element_type=jnp.float32)
        out = out + b_ref[...]                                    # (1, Fp_out)
        # LeakyReLU (negative_slope = 0.01, PyTorch default)
        o_ref[...] = jnp.where(out > 0.0, out, 0.01 * out).astype(o_ref.dtype)


def gcn_unit_pallas(x, edge_index, edge_attr, w0, w1, bias):
    """x: (N,F_in), edge_index: (2,E), edge_attr: (E,),
       w0/w1: (F_in,F_out), bias: (1,F_out)."""
    n, f_in = x.shape
    f_out = w0.shape[1]

    # Lane-dense feature padding; N padded to a multiple of 512 so tiles are
    # never the 128x128 fallback.
    fp_in = _round_up(f_in, 128)
    fp_out = _round_up(f_out, 128)
    npad = _round_up(n, 512)
    tk = 1024 if npad % 1024 == 0 else 512            # contraction tile
    tm = 512 if (npad // 512) >= 2 else 256           # >=2 row tiles if possible
    ni, nk = npad // tm, npad // tk

    # L_hat built padded, transposed-by-construction, emitted in bf16.
    lhat_p = build_cheb_propagation_matrix(edge_index, edge_attr, n,
                                           pad_to=npad, out_dtype=jnp.bfloat16)
    # x resident in VMEM (npad * 128 lanes * 2B -> a few hundred KiB here).
    x_p = jnp.zeros((npad, fp_in), jnp.bfloat16).at[:n, :f_in].set(
        x.astype(jnp.bfloat16))
    # Fused [W0; W1] weight in bf16 (f32 MXU accumulation in the kernel).
    w_p = jnp.zeros((2 * fp_in, fp_out), jnp.bfloat16)
    w_p = w_p.at[:f_in, :f_out].set(w0.astype(jnp.bfloat16))
    w_p = w_p.at[fp_in:fp_in + f_in, :f_out].set(w1.astype(jnp.bfloat16))
    b_p = jnp.zeros((1, fp_out), jnp.float32).at[:, :f_out].set(
        bias.astype(jnp.float32).reshape(1, f_out))

    # Block-sparse bookkeeping, O(E): flag each (row-tile, k-tile) of L_hat that
    # can contain a nonzero, and a DMA-redirect table that repeats the previous
    # nonzero tile's block index for all-zero tiles (so their DMA is skipped).
    src, dst = edge_index[0], edge_index[1]
    tile_flags = jnp.zeros((ni, nk), jnp.int32).at[dst // tm, src // tk].max(
        jnp.ones_like(src, dtype=jnp.int32))
    flat_flags = tile_flags.reshape(-1)
    pos = jnp.arange(ni * nk, dtype=jnp.int32)
    last_nz = jnp.maximum(
        jax.lax.cummax(jnp.where(flat_flags > 0, pos, -1)), 0)
    fetch_i = (last_nz // nk).astype(jnp.int32)
    fetch_k = (last_nz % nk).astype(jnp.int32)

    lhat_map = lambda i, k, fi, fk, fl: (fi[i * nk + k], fk[i * nk + k])
    const_map = lambda i, k, fi, fk, fl: (0, 0)
    row_map = lambda i, k, fi, fk, fl: (i, 0)

    # Explicit VMEM budget (double-buffered streamed operands + resident x).
    vmem_bytes = (
        2 * tm * tk * 2                 # L_hat tile (bf16) x2 buffers
        + 2 * npad * fp_in * 2          # resident x (bf16)
        + 2 * (2 * fp_in) * fp_out * 2  # fused weights (bf16)
        + 2 * fp_out * 4                # bias
        + 2 * tm * fp_out * 4           # output block (f32)
        + tm * fp_in * 4)               # accumulator scratch
    vmem_limit = min(int(vmem_bytes * 2) + (4 << 20), 64 << 20)

    out_p = pl.pallas_call(
        gcn_unit_kernel,
        out_shape=jax.ShapeDtypeStruct((npad, fp_out), jnp.float32),
        grid_spec=pltpu.PrefetchScalarGridSpec(
            num_scalar_prefetch=3,
            grid=(ni, nk),
            in_specs=[
                pl.BlockSpec((tm, tk), lhat_map),                # L_hat tile
                pl.BlockSpec((npad, fp_in), const_map),          # resident x
                pl.BlockSpec((2 * fp_in, fp_out), const_map),    # fused W (bf16)
                pl.BlockSpec((1, fp_out), const_map),            # bias
            ],
            out_specs=pl.BlockSpec((tm, fp_out), row_map),
            scratch_shapes=[pltpu.VMEM((tm, fp_in), jnp.float32)],
        ),
        compiler_params=pltpu.CompilerParams(
            dimension_semantics=("parallel", "arbitrary"),
            vmem_limit_bytes=vmem_limit),
    )(fetch_i, fetch_k, flat_flags, lhat_p, x_p, w_p, b_p)

    return out_p[:n, :f_out]


# ----------------------------------------------------------------------------
# GCN_Unit forward (default: cheb base layer, no norm, LeakyReLU)
# ----------------------------------------------------------------------------
@jax.jit
def gcn_unit_forward(x, edge_index, edge_attr, nroi, params,
                     batch_idx=None, style_vector=None):
    # normalization_f=None => nroi / batch_idx / style_vector unused (defaults).
    del nroi, batch_idx, style_vector
    return gcn_unit_pallas(x, edge_index, edge_attr,
                           params["w0"], params["w1"], params["bias"])


# TODO(synk): 'gcn'/'gat' base layers and the Batch/Instance/Layer/Graph/AdaIN
# normalization branches are not exercised by the default constructor args and
# are not implemented.


if __name__ == "__main__":
    key = jax.random.PRNGKey(0)
    k_x, k_w0, k_w1, k_b, k_e, k_extra = jax.random.split(key, 6)

    f_in, f_out = 4, 8
    # ChebConv(K=2) params, stored transposed to (F_in, F_out) so kernel does x @ W.
    params = {
        "w0": jax.random.normal(k_w0, (f_in, f_out), jnp.float32) * 0.1,
        "w1": jax.random.normal(k_w1, (f_in, f_out), jnp.float32) * 0.1,
        "bias": jax.random.normal(k_b, (1, f_out), jnp.float32) * 0.1,
    }

    def reference(x, edge_index, edge_attr, p):
        # Mirror the kernel's bf16 operand rounding (f32 accumulation).
        n = x.shape[0]
        hp = jax.lax.Precision.HIGHEST
        bf = lambda a: a.astype(jnp.bfloat16).astype(jnp.float32)
        lhat = build_cheb_propagation_matrix(edge_index, edge_attr, n)
        x_b, lhat_b = bf(x), bf(lhat)
        tx1 = bf(jnp.dot(lhat_b, x_b, precision=hp))
        out = (jnp.dot(x_b, bf(p["w0"]), precision=hp)
               + jnp.dot(tx1, bf(p["w1"]), precision=hp) + p["bias"])
        return jnp.where(out > 0, out, 0.01 * out)

    def make_ring(n, k_edge, k_feat):
        src = jnp.arange(n, dtype=jnp.int32)
        ei = jnp.concatenate(
            [jnp.stack([src, (src + 1) % n]),
             jnp.stack([src, (src + 7) % n])], axis=1).astype(jnp.int32)
        ew = jax.random.uniform(k_edge, (ei.shape[1],), jnp.float32, 0.1, 1.0)
        xx = jax.random.normal(k_feat, (n, f_in), jnp.float32)
        return xx, ei, ew

    # ---- Test 1: small dense graph (2 graphs of nroi=8 nodes, single k tile) ----
    num_graphs, nroi = 2, 8
    n_nodes = num_graphs * nroi
    x = jax.random.normal(k_x, (n_nodes, f_in), jnp.float32)
    rows, cols = [], []
    for g in range(num_graphs):
        for i in range(nroi):
            for j in range(nroi):
                if i != j:
                    rows.append(g * nroi + i)
                    cols.append(g * nroi + j)
    edge_index = jnp.array([rows, cols], dtype=jnp.int32)            # (2, E)
    edge_attr = jax.random.uniform(k_e, (edge_index.shape[1],),
                                   jnp.float32, 0.1, 1.0)

    out = jax.block_until_ready(
        gcn_unit_forward(x, edge_index, edge_attr, nroi, params))
    ref = reference(x, edge_index, edge_attr, params)
    assert out.shape == (n_nodes, f_out)
    assert jnp.allclose(out, ref, atol=3e-3, rtol=3e-3)

    # ---- Test 2: sparse ring graph, n=300 (padding, 2 row tiles) ----
    k_e2, k_x2, k_e3, k_x3 = jax.random.split(k_extra, 4)
    x2, ei2, ew2 = make_ring(300, k_e2, k_x2)
    out2 = jax.block_until_ready(gcn_unit_forward(x2, ei2, ew2, nroi, params))
    ref2 = reference(x2, ei2, ew2, params)
    assert out2.shape == (300, f_out)
    assert jnp.allclose(out2, ref2, atol=3e-3, rtol=3e-3)

    # ---- Test 3: sparse ring graph, n=1200 (multi-tile grid + tile skipping) ----
    x3, ei3, ew3 = make_ring(1200, k_e3, k_x3)
    out3 = jax.block_until_ready(gcn_unit_forward(x3, ei3, ew3, nroi, params))
    ref3 = reference(x3, ei3, ew3, params)
    assert out3.shape == (1200, f_out)
    assert jnp.allclose(out3, ref3, atol=3e-3, rtol=3e-3)

    print("KERNEL_OK")
</pallas_src>

<mosaic_0001>
module attributes {stable_mosaic.version = 11 : i64} {
  func.func private @main(%arg0: i32) attributes {dimension_semantics = [#tpu.dimension_semantics<core_parallel>], iteration_bounds = array<i64: 2>, tpu.core_type = #tpu.core_type<sc_scalar_subcore>, window_params = []} {
    return
  }
}

module attributes {stable_mosaic.version = 11 : i64} {
  func.func private @main(%arg0: i32) attributes {dimension_semantics = [#tpu.dimension_semantics<core_parallel>], iteration_bounds = array<i64: 2>, tpu.core_type = #tpu.core_type<sc_scalar_subcore>, window_params = []} {
    return
  }
}

module attributes {stable_mosaic.version = 11 : i64} {
  func.func @gcn_unit_kernel(%arg0: i32, %arg1: i32, %arg2: memref<2xi32, #tpu.memory_space<smem>>, %arg3: memref<2xi32, #tpu.memory_space<smem>>, %arg4: memref<2xi32, #tpu.memory_space<smem>>, %arg5: memref<256x512xbf16, #tpu.memory_space<vmem>>, %arg6: memref<512x128xbf16, #tpu.memory_space<vmem>>, %arg7: memref<256x128xbf16, #tpu.memory_space<vmem>>, %arg8: memref<1x128xf32, #tpu.memory_space<vmem>>, %arg9: memref<256x128xf32, #tpu.memory_space<vmem>>, %arg10: memref<256x128xf32, #tpu.memory_space<vmem>>) attributes {dimension_semantics = [#tpu.dimension_semantics<parallel>, #tpu.dimension_semantics<arbitrary>], iteration_bounds = array<i64: 2, 1>, scalar_prefetch = 3 : i64, scratch_operands = 1 : i64, tpu.core_type = #tpu.core_type<tc>, window_params = [{transform_indices = @transform_0, window_bounds = array<i64: 256, 512>}, {pipeline_mode = #tpu.pipeline_mode<synchronous>, transform_indices = @transform_1, window_bounds = array<i64: 512, 128>}, {pipeline_mode = #tpu.pipeline_mode<synchronous>, transform_indices = @transform_2, window_bounds = array<i64: 256, 128>}, {pipeline_mode = #tpu.pipeline_mode<synchronous>, transform_indices = @transform_3, window_bounds = array<i64: 1, 128>}, {transform_indices = @transform_4, window_bounds = array<i64: 256, 128>}]} {
    %c0_i32 = arith.constant 0 : i32
    %0 = arith.cmpi eq, %arg1, %c0_i32 : i32
    %1 = arith.extui %0 : i1 to i32
    %c0_i32_0 = arith.constant 0 : i32
    %2 = arith.cmpi ne, %1, %c0_i32_0 : i32
    scf.if %2 {
      %cst = arith.constant 0.000000e+00 : f32
      %13 = vector.broadcast %cst : f32 to vector<256x128xf32>
      %c0 = arith.constant 0 : index
      %c0_5 = arith.constant 0 : index
      %14 = vector.load %arg10[%c0, %c0_5] : memref<256x128xf32, #tpu.memory_space<vmem>>, vector<256x128xf32>
      tpu.vector_store %arg10[%c0, %c0_5], %13 {strides = array<i32>} : memref<256x128xf32, #tpu.memory_space<vmem>>, vector<256x128xf32>,
    } else {
    }
    %c1_i32 = arith.constant 1 : i32
    %3 = arith.muli %arg0, %c1_i32 : i32
    %4 = arith.addi %3, %arg1 : i32
    %5 = arith.index_cast %4 : i32 to index
    %6 = memref.load %arg4[%5] : memref<2xi32, #tpu.memory_space<smem>>
    %c0_i32_1 = arith.constant 0 : i32
    %7 = arith.cmpi ne, %6, %c0_i32_1 : i32
    %8 = arith.extui %7 : i1 to i32
    %c0_i32_2 = arith.constant 0 : i32
    %9 = arith.cmpi ne, %8, %c0_i32_2 : i32
    scf.if %9 {
      %c512_i32 = arith.constant 512 : i32
      %13 = arith.muli %arg1, %c512_i32 : i32
      %14 = tpu.assume_multiple %13, 512 : i32
      %15 = arith.index_cast %14 : i32 to index
      %c0 = arith.constant 0 : index
      %16 = vector.load %arg6[%15, %c0] : memref<512x128xbf16, #tpu.memory_space<vmem>>, vector<512x128xbf16>
      %c0_5 = arith.constant 0 : index
      %c0_6 = arith.constant 0 : index
      %17 = vector.load %arg10[%c0_5, %c0_6] : memref<256x128xf32, #tpu.memory_space<vmem>>, vector<256x128xf32>
      %c0_7 = arith.constant 0 : index
      %c0_8 = arith.constant 0 : index
      %18 = vector.load %arg5[%c0_7, %c0_8] : memref<256x512xbf16, #tpu.memory_space<vmem>>, vector<256x512xbf16>
      %cst = arith.constant dense<0.000000e+00> : vector<256x128xf32>
      %19 = tpu.matmul %18, %16, %cst {dimension_numbers = #tpu.dot_dimension_numbers<[1], [0], [0], [1], [0, 0, 1, 1], [], []>} : vector<256x512xbf16>, vector<512x128xbf16>, vector<256x128xf32> -> vector<256x128xf32>
      %20 = arith.addf %17, %19 : vector<256x128xf32>
      %c0_9 = arith.constant 0 : index
      %c0_10 = arith.constant 0 : index
      %21 = vector.load %arg10[%c0_9, %c0_10] : memref<256x128xf32, #tpu.memory_space<vmem>>, vector<256x128xf32>
      tpu.vector_store %arg10[%c0_9, %c0_10], %20 {strides = array<i32>} : memref<256x128xf32, #tpu.memory_space<vmem>>, vector<256x128xf32>,
    } else {
    }
    %c0_i32_3 = arith.constant 0 : i32
    %10 = arith.cmpi eq, %arg1, %c0_i32_3 : i32
    %11 = arith.extui %10 : i1 to i32
    %c0_i32_4 = arith.constant 0 : i32
    %12 = arith.cmpi ne, %11, %c0_i32_4 : i32
    scf.if %12 {
      %c256_i32 = arith.constant 256 : i32
      %13 = arith.muli %arg0, %c256_i32 : i32
      %14 = tpu.assume_multiple %13, 256 : i32
      %15 = arith.index_cast %14 : i32 to index
      %c0 = arith.constant 0 : index
      %16 = vector.load %arg6[%15, %c0] : memref<512x128xbf16, #tpu.memory_space<vmem>>, vector<256x128xbf16>
      %c0_5 = arith.constant 0 : index
      %c0_6 = arith.constant 0 : index
      %17 = vector.load %arg10[%c0_5, %c0_6] : memref<256x128xf32, #tpu.memory_space<vmem>>, vector<256x128xf32>
      %18 = arith.truncf %17 : vector<256x128xf32> to vector<256x128xbf16>
      %c0_7 = arith.constant 0 : index
      %c0_8 = arith.constant 0 : index
      %19 = vector.load %arg7[%c0_7, %c0_8] : memref<256x128xbf16, #tpu.memory_space<vmem>>, vector<128x128xbf16>
      %cst = arith.constant dense<0.000000e+00> : vector<256x128xf32>
      %20 = tpu.matmul %16, %19, %cst {dimension_numbers = #tpu.dot_dimension_numbers<[1], [0], [0], [1], [0, 0, 1, 1], [], []>} : vector<256x128xbf16>, vector<128x128xbf16>, vector<256x128xf32> -> vector<256x128xf32>
      %c128 = arith.constant 128 : index
      %c0_9 = arith.constant 0 : index
      %21 = vector.load %arg7[%c128, %c0_9] : memref<256x128xbf16, #tpu.memory_space<vmem>>, vector<128x128xbf16>
      %cst_10 = arith.constant dense<0.000000e+00> : vector<256x128xf32>
      %22 = tpu.matmul %18, %21, %cst_10 {dimension_numbers = #tpu.dot_dimension_numbers<[1], [0], [0], [1], [0, 0, 1, 1], [], []>} : vector<256x128xbf16>, vector<128x128xbf16>, vector<256x128xf32> -> vector<256x128xf32>
      %23 = arith.addf %20, %22 : vector<256x128xf32>
      %c0_11 = arith.constant 0 : index
      %c0_12 = arith.constant 0 : index
      %24 = vector.load %arg8[%c0_11, %c0_12] : memref<1x128xf32, #tpu.memory_space<vmem>>, vector<1x128xf32>
      %25 = vector.broadcast %24 : vector<1x128xf32> to vector<256x128xf32>
      %26 = arith.addf %23, %25 : vector<256x128xf32>
      %cst_13 = arith.constant 0.000000e+00 : f32
      %27 = vector.broadcast %cst_13 : f32 to vector<256x128xf32>
      %28 = arith.cmpf ogt, %26, %27 : vector<256x128xf32>
      %cst_14 = arith.constant 0.00999999977 : f32
      %29 = vector.broadcast %cst_14 : f32 to vector<256x128xf32>
      %30 = arith.mulf %29, %26 : vector<256x128xf32>
      %31 = arith.select %28, %26, %30 : vector<256x128xi1>, vector<256x128xf32>
      %c0_15 = arith.constant 0 : index
      %c0_16 = arith.constant 0 : index
      %32 = vector.load %arg9[%c0_15, %c0_16] : memref<256x128xf32, #tpu.memory_space<vmem>>, vector<256x128xf32>
      tpu.vector_store %arg9[%c0_15, %c0_16], %31 {strides = array<i32>} : memref<256x128xf32, #tpu.memory_space<vmem>>, vector<256x128xf32>,
    } else {
    }
    return
  }
  func.func @transform_0(%arg0: i32, %arg1: i32, %arg2: memref<2xi32, #tpu.memory_space<smem>>, %arg3: memref<2xi32, #tpu.memory_space<smem>>, %arg4: memref<2xi32, #tpu.memory_space<smem>>) -> (i32, i32) {
    %c1_i32 = arith.constant 1 : i32
    %0 = arith.muli %arg0, %c1_i32 : i32
    %1 = arith.addi %0, %arg1 : i32
    %2 = arith.index_cast %1 : i32 to index
    %3 = memref.load %arg2[%2] : memref<2xi32, #tpu.memory_space<smem>>
    %c1_i32_0 = arith.constant 1 : i32
    %4 = arith.muli %arg0, %c1_i32_0 : i32
    %5 = arith.addi %4, %arg1 : i32
    %6 = arith.index_cast %5 : i32 to index
    %7 = memref.load %arg3[%6] : memref<2xi32, #tpu.memory_space<smem>>
    %c0_i32 = arith.constant 0 : i32
    return %3, %7 : i32, i32
  }
  func.func @transform_1(%arg0: i32, %arg1: i32, %arg2: memref<2xi32, #tpu.memory_space<smem>>, %arg3: memref<2xi32, #tpu.memory_space<smem>>, %arg4: memref<2xi32, #tpu.memory_space<smem>>) -> (i32, i32) {
    %c0_i32 = arith.constant 0 : i32
    %c0_i32_0 = arith.constant 0 : i32
    %c0_i32_1 = arith.constant 0 : i32
    return %c0_i32, %c0_i32_0 : i32, i32
  }
  func.func @transform_2(%arg0: i32, %arg1: i32, %arg2: memref<2xi32, #tpu.memory_space<smem>>, %arg3: memref<2xi32, #tpu.memory_space<smem>>, %arg4: memref<2xi32, #tpu.memory_space<smem>>) -> (i32, i32) {
    %c0_i32 = arith.constant 0 : i32
    %c0_i32_0 = arith.constant 0 : i32
    %c0_i32_1 = arith.constant 0 : i32
    return %c0_i32, %c0_i32_0 : i32, i32
  }
  func.func @transform_3(%arg0: i32, %arg1: i32, %arg2: memref<2xi32, #tpu.memory_space<smem>>, %arg3: memref<2xi32, #tpu.memory_space<smem>>, %arg4: memref<2xi32, #tpu.memory_space<smem>>) -> (i32, i32) {
    %c0_i32 = arith.constant 0 : i32
    %c0_i32_0 = arith.constant 0 : i32
    %c0_i32_1 = arith.constant 0 : i32
    return %c0_i32, %c0_i32_0 : i32, i32
  }
  func.func @transform_4(%arg0: i32, %arg1: i32, %arg2: memref<2xi32, #tpu.memory_space<smem>>, %arg3: memref<2xi32, #tpu.memory_space<smem>>, %arg4: memref<2xi32, #tpu.memory_space<smem>>) -> (i32, i32) {
    %c0_i32 = arith.constant 0 : i32
    %c0_i32_0 = arith.constant 0 : i32
    return %arg0, %c0_i32 : i32, i32
  }
}

</mosaic_0001>

<llo_original>
// kernel: gcn_unit_forward.1
$region0: #{gcn_unit_forward.1}
  #allocation0 [shape = 'u32[]', space=smem, size = 0x4, offset = 0x4, fixed_abs, tag = 'smem constant byte address 0x4 - core index']
  #allocation1 [shape = 'u32[144,128]{1,0:T(1,128)}', space=vmem, size = 0x12000, scoped, tag = 'internal scratch']
  #allocation2 [shape = 'f32[256,128]{1,0:T(8,128)}', space=vmem, size = 0x20000, scoped, tag = 'scratch operand']
  #allocation3 [shape = 's32[1]{0}', space=sflag, size = 0x4, scoped, tag = 'scoped memory for gcn_unit_forward.1']
  #allocation4 [shape = 'u8[512]{0}', space=smem, size = 0x200, scoped, tag = 'prefetched SMEM operand 0']
  #allocation5 [shape = 'u8[512]{0}', space=smem, size = 0x200, scoped, tag = 'prefetched SMEM operand 1']
  #allocation6 [shape = 'u8[512]{0}', space=smem, size = 0x200, scoped, tag = 'prefetched SMEM operand 2']
  %s0 = inlined_call_operand.vmem [shape: s32[2], index: 0, kind: input, shape index: {}]
  %s1 = inlined_call_operand.vmem [shape: s32[2], index: 1, kind: input, shape index: {}]
  %s2 = inlined_call_operand.vmem [shape: s32[2], index: 2, kind: input, shape index: {}]
  %s3 = inlined_call_operand.vmem [shape: bf16[512,512], index: 3, kind: input, shape index: {}]
  %s4 = inlined_call_operand.vmem [shape: bf16[512,128], index: 4, kind: input, shape index: {}]
  %s5 = inlined_call_operand.vmem [shape: bf16[256,128], index: 5, kind: input, shape index: {}]
  %s6 = inlined_call_operand.vmem [shape: f32[1,128], index: 6, kind: input, shape index: {}]
  %s7 = inlined_call_operand.vmem [shape: f32[512,128], index: 7, kind: output, shape index: {}]
  %s8 = sld [smem:[#allocation0]]
  $region61: #{gcn_unit_forward.1} parent=0
    _
  %s10 = ssub.s32 1, %s8
  %s11 = scalar_select 0, %s10, %s8
  %s12 = sshll.u32 %s0, 4
  %s13 = int_to_ptr.vmem [resolvable:$true] %s12
  %15 = dma.vmem_to_smem %s13, 16, [#allocation4], [#allocation3]
  %s16 = sshll.u32 %s1, 4
  %s17 = int_to_ptr.vmem [resolvable:$true] %s16
  %19 = dma.vmem_to_smem %s17, 16, [#allocation5], [#allocation3]
  %s20 = sshll.u32 %s2, 4
  %s21 = int_to_ptr.vmem [resolvable:$true] %s20
  %23 = dma.vmem_to_smem %s21, 16, [#allocation6], [#allocation3]
  %24 = dma.done [#allocation3], 48
  %25 = sfence
  loop: start=0, step=1, limit=4
  $region2: #{gcn_unit_forward.1} parent=0 // loop_pre_header
    _
  $region3: #{gcn_unit_forward.1} parent=0 // loop_header
    %s27 = sphi 0, %s31
    %p28 = scmp.ge.s32.totalorder %s27, 4
    %s34 = sphi 0, %s46
    %s35 = sphi 0, %s42
    %s36 = sphi 0, %s34
    %s37 = sphi 0, %s35
    %s38 = sphi 0, %s36
    %s39 = sphi 0, %s37
    %s57 = sphi 0, %s59
    %s60 = sphi 0, %s57
    %s61 = sphi 0, %s60
    %s77 = sphi 0, %s61
    %s81 = sphi 0, %s81
    %s83 = sphi 0, %s81
    %s84 = sphi 0, %s83
    %s98 = sphi 0, %s84
    %s102 = sphi 0, %s102
    %s104 = sphi 0, %s102
    %s105 = sphi 0, %s104
    %s119 = sphi 0, %s105
    %s123 = sphi 0, %s123
    %s125 = sphi 0, %s123
    %s126 = sphi 0, %s125
    %s140 = sphi 0, %s126
    %s146 = sphi 0, %s148
    %s149 = sphi 0, %s146
    %s150 = sphi 0, %s149
    %s166 = sphi 0, %s150
  $region4: #{gcn_unit_forward.1} parent=0 // loop_header_branch
    %30 = sbr.rel (%p28) target = $region8
  $region5: #{gcn_unit_forward.1} parent=0 // loop_body
    %s32 = ssub.s32 %s27, 1
    %s33 = ssub.s32 %s27, 2
    %s40 = sadd.s32 1, %s35
    %p41 = scmp.ge.s32.totalorder %s40, 1
    %s42 = scalar_select %p41, 0, %s40
    %s43 = sadd.s32 1, %s34
    %s44 = scalar_select %p41, %s43, %s34
    %p45 = scmp.ge.s32.totalorder %s44, 2
    %s46 = scalar_select %p45, 0, %s44
    %s47 = sadd.s32 %s34, %s35
    %s48 = sld [smem:[#allocation4 + %s47]]
    %s49 = sld [smem:[#allocation5 + %s47]]
    %s50 = sadd.s32 %s46, %s42
    %s51 = sld [smem:[#allocation4 + %s50]]
    %s52 = sld [smem:[#allocation5 + %s50]]
    %s53 = ssub.s32 %s48, %s51
    %s54 = ssub.s32 %s49, %s52
    %s55 = sor.u32 %s53, %s54
    %p56 = scmp.eq.s32.totalorder %s55, 0
    %s58 = sadd.s32 %s57, 1
    %s59 = scalar_select %p56, %s57, %s58
    %p62 = pneg %p56
    %p63 = scmp.eq.s32.totalorder %s27, 1
    %p64 = por %p62, %p63
    %p65 = scmp.ne.s32.totalorder %s57, %s60
    %p66 = scmp.eq.s32.totalorder %s27, 0
    %p67 = por %p65, %p66
    %p68 = scmp.ne.s32.totalorder %s57, %s60
    %p69 = scmp.eq.s32.totalorder %s32, 1
    %p70 = por %p68, %p69
    %p71 = scmp.ne.s32.totalorder %s60, %s61
    %p72 = scmp.eq.s32.totalorder %s32, 0
    %p73 = por %p71, %p72
    %p74 = scmp.ne.s32.totalorder %s60, %s61
    %p75 = scmp.eq.s32.totalorder %s33, 1
    %p76 = por %p74, %p75
    %p78 = scmp.ne.s32.totalorder %s61, %s77
    %p79 = scmp.eq.s32.totalorder %s33, 0
    %p80 = por %p78, %p79
    %s82 = sadd.s32 %s81, 1
    %p85 = scmp.eq.s32.totalorder %s27, 1
    %p86 = scmp.ne.s32.totalorder %s81, %s83
    %p87 = scmp.eq.s32.totalorder %s27, 0
    %p88 = por %p86, %p87
    %p89 = scmp.ne.s32.totalorder %s81, %s83
    %p90 = scmp.eq.s32.totalorder %s32, 1
    %p91 = por %p89, %p90
    %p92 = scmp.ne.s32.totalorder %s83, %s84
    %p93 = scmp.eq.s32.totalorder %s32, 0
    %p94 = por %p92, %p93
    %p95 = scmp.ne.s32.totalorder %s83, %s84
    %p96 = scmp.eq.s32.totalorder %s33, 1
    %p97 = por %p95, %p96
    %p99 = scmp.ne.s32.totalorder %s84, %s98
    %p100 = scmp.eq.s32.totalorder %s33, 0
    %p101 = por %p99, %p100
    %s103 = sadd.s32 %s102, 1
    %p106 = scmp.eq.s32.totalorder %s27, 1
    %p107 = scmp.ne.s32.totalorder %s102, %s104
    %p108 = scmp.eq.s32.totalorder %s27, 0
    %p109 = por %p107, %p108
    %p110 = scmp.ne.s32.totalorder %s102, %s104
    %p111 = scmp.eq.s32.totalorder %s32, 1
    %p112 = por %p110, %p111
    %p113 = scmp.ne.s32.totalorder %s104, %s105
    %p114 = scmp.eq.s32.totalorder %s32, 0
    %p115 = por %p113, %p114
    %p116 = scmp.ne.s32.totalorder %s104, %s105
    %p117 = scmp.eq.s32.totalorder %s33, 1
    %p118 = por %p116, %p117
    %p120 = scmp.ne.s32.totalorder %s105, %s119
    %p121 = scmp.eq.s32.totalorder %s33, 0
    %p122 = por %p120, %p121
    %s124 = sadd.s32 %s123, 1
    %p127 = scmp.eq.s32.totalorder %s27, 1
    %p128 = scmp.ne.s32.totalorder %s123, %s125
    %p129 = scmp.eq.s32.totalorder %s27, 0
    %p130 = por %p128, %p129
    %p131 = scmp.ne.s32.totalorder %s123, %s125
    %p132 = scmp.eq.s32.totalorder %s32, 1
    %p133 = por %p131, %p132
    %p134 = scmp.ne.s32.totalorder %s125, %s126
    %p135 = scmp.eq.s32.totalorder %s32, 0
    %p136 = por %p134, %p135
    %p137 = scmp.ne.s32.totalorder %s125, %s126
    %p138 = scmp.eq.s32.totalorder %s33, 1
    %p139 = por %p137, %p138
    %p141 = scmp.ne.s32.totalorder %s126, %s140
    %p142 = scmp.eq.s32.totalorder %s33, 0
    %p143 = por %p141, %p142
    %s144 = ssub.s32 %s34, %s46
    %p145 = scmp.eq.s32.totalorder %s144, 0
    %s147 = sadd.s32 %s146, 1
    %s148 = scalar_select %p145, %s146, %s147
    %p151 = pneg %p145
    %p152 = scmp.eq.s32.totalorder %s27, 1
    %p153 = por %p151, %p152
    %p154 = scmp.ne.s32.totalorder %s146, %s149
    %p155 = scmp.eq.s32.totalorder %s27, 0
    %p156 = por %p154, %p155
    %p157 = scmp.ne.s32.totalorder %s146, %s149
    %p158 = scmp.eq.s32.totalorder %s32, 1
    %p159 = por %p157, %p158
    %p160 = scmp.ne.s32.totalorder %s149, %s150
    %p161 = scmp.eq.s32.totalorder %s32, 0
    %p162 = por %p160, %p161
    %p163 = scmp.ne.s32.totalorder %s149, %s150
    %p164 = scmp.eq.s32.totalorder %s33, 1
    %p165 = por %p163, %p164
    %p167 = scmp.ne.s32.totalorder %s150, %s166
    %p168 = scmp.eq.s32.totalorder %s33, 0
    %p169 = por %p167, %p168
    %p170 = scmp.le.s32.totalorder 1, %s27
    %p171 = scmp.lt.s32.totalorder %s27, 3
    %p172 = pnand %p170, %p171
    %p173 = pneg %p172
    // Predicated region
    $region9: #{gcn_unit_forward.1} parent=5 // pred_check
      _
    $region10: #{gcn_unit_forward.1} parent=5 // pred_check_branch
      %175 = sbr.rel (%p172) target = $region12
    $region11: #{gcn_unit_forward.1} parent=5 // pred_region
      %s176 = ssub.s32 %s27, 1
      // Predicated region
      $region13: #{gcn_unit_forward.1} parent=11 // pred_check
        %p177 = pneg %p94
      $region14: #{gcn_unit_forward.1} parent=11 // pred_check_branch
        %179 = sbr.rel (%p177) target = $region16
      $region15: #{gcn_unit_forward.1} parent=11 // pred_region
        _
      $region16: #{gcn_unit_forward.1} parent=11 // pred_fallthru
        _
      // Predicated region
      $region17: #{gcn_unit_forward.1} parent=11 // pred_check
        %p180 = pneg %p115
      $region18: #{gcn_unit_forward.1} parent=11 // pred_check_branch
        %182 = sbr.rel (%p180) target = $region20
      $region19: #{gcn_unit_forward.1} parent=11 // pred_region
        _
      $region20: #{gcn_unit_forward.1} parent=11 // pred_fallthru
        _
      // Predicated region
      $region21: #{gcn_unit_forward.1} parent=11 // pred_check
        %p183 = pneg %p136
      $region22: #{gcn_unit_forward.1} parent=11 // pred_check_branch
        %185 = sbr.rel (%p183) target = $region24
      $region23: #{gcn_unit_forward.1} parent=11 // pred_region
        _
      $region24: #{gcn_unit_forward.1} parent=11 // pred_fallthru
        _
    $region12: #{gcn_unit_forward.1} parent=5 // pred_fallthru
      _
    %p186 = scmp.lt.s32.totalorder %s27, 2
    // Predicated region
    $region25: #{gcn_unit_forward.1} parent=5 // pred_check
      %p187 = pneg %p186
    $region26: #{gcn_unit_forward.1} parent=5 // pred_check_branch
      %189 = sbr.rel (%p187) target = $region28
    $region27: #{gcn_unit_forward.1} parent=5 // pred_region
      // Predicated region
      $region29: #{gcn_unit_forward.1} parent=27 // pred_check
        %p190 = pneg %p67
      $region30: #{gcn_unit_forward.1} parent=27 // pred_check_branch
        %192 = sbr.rel (%p190) target = $region32
      $region31: #{gcn_unit_forward.1} parent=27 // pred_region
        %s193 = sadd.s32 %s34, %s35
        %s194 = sld [smem:[#allocation4 + %s193]]
        %s195 = sld [smem:[#allocation5 + %s193]]
        %s196 = smul.u32 32, %s194
        %s197 = smul.u32 4, %s195
        %p198 = scmp.lt.s32.totalorder %s196, 63
        %s199 = scalar_select %p198, %s196, 63
        %p200 = scmp.lt.s32.totalorder %s197, 3
        %s201 = scalar_select %p200, %s197, 3
        %s202 = smul.addr %s199, 4
        %s203 = sadd.s32 %s201, %s202
        %s204 = smul.addr %s203, 4
        %s205 = scalar_lea.vmem %s3, %s204
        %s206 = sadd.s32 %s34, %s35
        %s207 = sld [smem:[#allocation4 + %s206]]
        %s208 = sld [smem:[#allocation5 + %s206]]
        %s209 = smul.u32 32, %s207
        %s210 = smul.u32 4, %s208
      $region32: #{gcn_unit_forward.1} parent=27 // pred_fallthru
        _
    $region28: #{gcn_unit_forward.1} parent=5 // pred_fallthru
      _
    %p211 = scmp.le.s32.totalorder 1, %s27
    %p212 = scmp.lt.s32.totalorder %s27, 3
    %p213 = pnand %p211, %p212
    %p214 = pneg %p213
    // Predicated region
    $region33: #{gcn_unit_forward.1} parent=5 // pred_check
      _
    $region34: #{gcn_unit_forward.1} parent=5 // pred_check_branch
      %216 = sbr.rel (%p213) target = $region36
    $region35: #{gcn_unit_forward.1} parent=5 // pred_region
      %s217 = ssub.s32 %s27, 1
      %s218 = sadd.s32 %s36, %s37
      %s219 = sld [smem:[#allocation4 + %s218]]
      %s220 = sld [smem:[#allocation5 + %s218]]
      %s221 = smul.u32 32, %s219
      %s222 = smul.u32 4, %s220
      %p223 = scmp.lt.s32.totalorder %s221, 63
      %s224 = scalar_select %p223, %s221, 63
      %p225 = scmp.lt.s32.totalorder %s222, 3
      %s226 = scalar_select %p225, %s222, 3
      %s227 = smul.addr %s224, 4
      %s228 = sadd.s32 %s226, %s227
      %s229 = smul.addr %s228, 4
      %s230 = scalar_lea.vmem %s3, %s229
      %p231 = pneg %p73
      %p232 = pneg %p70
      %p233 = pneg %p94
      %p234 = pneg %p91
      %p235 = pneg %p115
      %p236 = pneg %p112
      %p237 = pneg %p136
      %p238 = pneg %p133
      %p239 = pneg %p162
      %p240 = pneg %p159
      %s241 = smul.u32 32, %s36
      %p242 = scmp.lt.s32.totalorder %s241, 63
      %s243 = scalar_select %p242, %s241, 63
      %s244 = smul.addr %s243, 8
      %s245 = scalar_lea.vmem %s7, %s244
      %s246 = sadd.s32 %s36, %s37
      %s247 = sld [smem:[#allocation4 + %s246]]
      %s248 = sld [smem:[#allocation5 + %s246]]
      %s249 = smul.u32 32, %s247
      %s250 = smul.u32 4, %s248
      %p251 = scmp.lt.s32.totalorder %s249, 63
      %s252 = scalar_select %p251, %s249, 63
      %p253 = scmp.lt.s32.totalorder %s250, 3
      %s254 = scalar_select %p253, %s250, 3
      %s255 = smul.addr %s252, 4
      %s256 = sadd.s32 %s254, %s255
      %s257 = smul.addr %s256, 4
      %s258 = scalar_lea.vmem %s3, %s257
      %s259 = sadd.s32 %s36, %s37
      %s260 = sld [smem:[#allocation4 + %s259]]
      %s261 = sld [smem:[#allocation5 + %s259]]
      %s262 = smul.u32 32, %s260
      %s263 = smul.u32 4, %s261
      %s264 = smul.u32 32, %s36
      %p265 = scmp.lt.s32.totalorder %s264, 63
      %s266 = scalar_select %p265, %s264, 63
      %s267 = smul.addr %s266, 8
      %s268 = scalar_lea.vmem %s7, %s267
      %s269 = smul.u32 32, %s36
      %p271 = scmp.eq.s32.totalorder %s37, 0
      // Predicated region
      $region37: #{gcn_unit_forward.1} parent=35 // pred_check
        %p272 = pneg %p271
      $region38: #{gcn_unit_forward.1} parent=35 // pred_check_branch
        %274 = sbr.rel (%p272) target = $region40
      $region39: #{gcn_unit_forward.1} parent=35 // pred_region
        %275 = vst [vmem:[#allocation2] sm:$0xff] 0.0
        %276 = vst [vmem:[#allocation2 + $0x8] sm:$0xff] 0.0
        %277 = vst [vmem:[#allocation2 + $0x10] sm:$0xff] 0.0
        %278 = vst [vmem:[#allocation2 + $0x18] sm:$0xff] 0.0
        %279 = vst [vmem:[#allocation2 + $0x20] sm:$0xff] 0.0
        %280 = vst [vmem:[#allocation2 + $0x28] sm:$0xff] 0.0
        %281 = vst [vmem:[#allocation2 + $0x30] sm:$0xff] 0.0
        %282 = vst [vmem:[#allocation2 + $0x38] sm:$0xff] 0.0
        %283 = vst [vmem:[#allocation2 + $0x40] sm:$0xff] 0.0
        %284 = vst [vmem:[#allocation2 + $0x48] sm:$0xff] 0.0
        %285 = vst [vmem:[#allocation2 + $0x50] sm:$0xff] 0.0
        %286 = vst [vmem:[#allocation2 + $0x58] sm:$0xff] 0.0
        %287 = vst [vmem:[#allocation2 + $0x60] sm:$0xff] 0.0
        %288 = vst [vmem:[#allocation2 + $0x68] sm:$0xff] 0.0
        %289 = vst [vmem:[#allocation2 + $0x70] sm:$0xff] 0.0
        %290 = vst [vmem:[#allocation2 + $0x78] sm:$0xff] 0.0
        %291 = vst [vmem:[#allocation2 + $0x80] sm:$0xff] 0.0
        %292 = vst [vmem:[#allocation2 + $0x88] sm:$0xff] 0.0
        %293 = vst [vmem:[#allocation2 + $0x90] sm:$0xff] 0.0
        %294 = vst [vmem:[#allocation2 + $0x98] sm:$0xff] 0.0
        %295 = vst [vmem:[#allocation2 + $0xa0] sm:$0xff] 0.0
        %296 = vst [vmem:[#allocation2 + $0xa8] sm:$0xff] 0.0
        %297 = vst [vmem:[#allocation2 + $0xb0] sm:$0xff] 0.0
        %298 = vst [vmem:[#allocation2 + $0xb8] sm:$0xff] 0.0
        %299 = vst [vmem:[#allocation2 + $0xc0] sm:$0xff] 0.0
        %300 = vst [vmem:[#allocation2 + $0xc8] sm:$0xff] 0.0
        %301 = vst [vmem:[#allocation2 + $0xd0] sm:$0xff] 0.0
        %302 = vst [vmem:[#allocation2 + $0xd8] sm:$0xff] 0.0
        %303 = vst [vmem:[#allocation2 + $0xe0] sm:$0xff] 0.0
        %304 = vst [vmem:[#allocation2 + $0xe8] sm:$0xff] 0.0
        %305 = vst [vmem:[#allocation2 + $0xf0] sm:$0xff] 0.0
        %306 = vst [vmem:[#allocation2 + $0xf8] sm:$0xff] 0.0
      $region40: #{gcn_unit_forward.1} parent=35 // pred_fallthru
        _
      %s307 = sadd.s32 %s36, %s37
      %s308 = sld [smem:[#allocation6 + %s307]]
      %p309 = scmp.ne.s32.totalorder %s308, 0
      // Predicated region
      $region41: #{gcn_unit_forward.1} parent=35 // pred_check
        %p310 = pneg %p309
      $region42: #{gcn_unit_forward.1} parent=35 // pred_check_branch
        %312 = sbr.rel (%p310) target = $region44
      $region43: #{gcn_unit_forward.1} parent=35 // pred_region
        %s313 = smul.u32 %s37, 512
        %s314 = sshra.s32 %s313, 3
        %s315 = sand.u32 %s313, 7
        %s316 = smul.addr %s314, 4
        %s317 = scalar_lea.vmem %s4, %s316
        %v318 = vld [vmem:[%s317] sm:$0xf]
        %v319 = vld [vmem:[%s317 + $0x4] sm:$0xf]
        %v320 = vld [vmem:[%s317 + $0x8] sm:$0xf]
        %v321 = vld [vmem:[%s317 + $0xc] sm:$0xf]
        %v322 = vld [vmem:[%s317 + $0x10] sm:$0xf]
        %v323 = vld [vmem:[%s317 + $0x14] sm:$0xf]
        %v324 = vld [vmem:[%s317 + $0x18] sm:$0xf]
        %v325 = vld [vmem:[%s317 + $0x1c] sm:$0xf]
        %v326 = vld [vmem:[%s317 + $0x20] sm:$0xf]
        %v327 = vld [vmem:[%s317 + $0x24] sm:$0xf]
        %v328 = vld [vmem:[%s317 + $0x28] sm:$0xf]
        %v329 = vld [vmem:[%s317 + $0x2c] sm:$0xf]
        %v330 = vld [vmem:[%s317 + $0x30] sm:$0xf]
        %v331 = vld [vmem:[%s317 + $0x34] sm:$0xf]
        %v332 = vld [vmem:[%s317 + $0x38] sm:$0xf]
        %v333 = vld [vmem:[%s317 + $0x3c] sm:$0xf]
        %v334 = vld [vmem:[%s317 + $0x40] sm:$0xf]
        %v335 = vld [vmem:[%s317 + $0x44] sm:$0xf]
        %v336 = vld [vmem:[%s317 + $0x48] sm:$0xf]
        %v337 = vld [vmem:[%s317 + $0x4c] sm:$0xf]
        %v338 = vld [vmem:[%s317 + $0x50] sm:$0xf]
        %v339 = vld [vmem:[%s317 + $0x54] sm:$0xf]
        %v340 = vld [vmem:[%s317 + $0x58] sm:$0xf]
        %v341 = vld [vmem:[%s317 + $0x5c] sm:$0xf]
        %v342 = vld [vmem:[%s317 + $0x60] sm:$0xf]
        %v343 = vld [vmem:[%s317 + $0x64] sm:$0xf]
        %v344 = vld [vmem:[%s317 + $0x68] sm:$0xf]
        %v345 = vld [vmem:[%s317 + $0x6c] sm:$0xf]
        %v346 = vld [vmem:[%s317 + $0x70] sm:$0xf]
        %v347 = vld [vmem:[%s317 + $0x74] sm:$0xf]
        %v348 = vld [vmem:[%s317 + $0x78] sm:$0xf]
        %v349 = vld [vmem:[%s317 + $0x7c] sm:$0xf]
        %v350 = vld [vmem:[%s317 + $0x80] sm:$0xf]
        %v351 = vld [vmem:[%s317 + $0x84] sm:$0xf]
        %v352 = vld [vmem:[%s317 + $0x88] sm:$0xf]
        %v353 = vld [vmem:[%s317 + $0x8c] sm:$0xf]
        %v354 = vld [vmem:[%s317 + $0x90] sm:$0xf]
        %v355 = vld [vmem:[%s317 + $0x94] sm:$0xf]
        %v356 = vld [vmem:[%s317 + $0x98] sm:$0xf]
        %v357 = vld [vmem:[%s317 + $0x9c] sm:$0xf]
        %v358 = vld [vmem:[%s317 + $0xa0] sm:$0xf]
        %v359 = vld [vmem:[%s317 + $0xa4] sm:$0xf]
        %v360 = vld [vmem:[%s317 + $0xa8] sm:$0xf]
        %v361 = vld [vmem:[%s317 + $0xac] sm:$0xf]
        %v362 = vld [vmem:[%s317 + $0xb0] sm:$0xf]
        %v363 = vld [vmem:[%s317 + $0xb4] sm:$0xf]
        %v364 = vld [vmem:[%s317 + $0xb8] sm:$0xf]
        %v365 = vld [vmem:[%s317 + $0xbc] sm:$0xf]
        %v366 = vld [vmem:[%s317 + $0xc0] sm:$0xf]
        %v367 = vld [vmem:[%s317 + $0xc4] sm:$0xf]
        %v368 = vld [vmem:[%s317 + $0xc8] sm:$0xf]
        %v369 = vld [vmem:[%s317 + $0xcc] sm:$0xf]
        %v370 = vld [vmem:[%s317 + $0xd0] sm:$0xf]
        %v371 = vld [vmem:[%s317 + $0xd4] sm:$0xf]
        %v372 = vld [vmem:[%s317 + $0xd8] sm:$0xf]
        %v373 = vld [vmem:[%s317 + $0xdc] sm:$0xf]
        %v374 = vld [vmem:[%s317 + $0xe0] sm:$0xf]
        %v375 = vld [vmem:[%s317 + $0xe4] sm:$0xf]
        %v376 = vld [vmem:[%s317 + $0xe8] sm:$0xf]
        %v377 = vld [vmem:[%s317 + $0xec] sm:$0xf]
        %v378 = vld [vmem:[%s317 + $0xf0] sm:$0xf]
        %v379 = vld [vmem:[%s317 + $0xf4] sm:$0xf]
        %v380 = vld [vmem:[%s317 + $0xf8] sm:$0xf]
        %v381 = vld [vmem:[%s317 + $0xfc] sm:$0xf]
        %v382 = vld [vmem:[#allocation2] sm:$0xff]
        %v383 = vld [vmem:[#allocation2 + $0x8] sm:$0xff]
        %v384 = vld [vmem:[#allocation2 + $0x10] sm:$0xff]
        %v385 = vld [vmem:[#allocation2 + $0x18] sm:$0xff]
        %v386 = vld [vmem:[#allocation2 + $0x20] sm:$0xff]
        %v387 = vld [vmem:[#allocation2 + $0x28] sm:$0xff]
        %v388 = vld [vmem:[#allocation2 + $0x30] sm:$0xff]
        %v389 = vld [vmem:[#allocation2 + $0x38] sm:$0xff]
        %v390 = vld [vmem:[#allocation2 + $0x40] sm:$0xff]
        %v391 = vld [vmem:[#allocation2 + $0x48] sm:$0xff]
        %v392 = vld [vmem:[#allocation2 + $0x50] sm:$0xff]
        %v393 = vld [vmem:[#allocation2 + $0x58] sm:$0xff]
        %v394 = vld [vmem:[#allocation2 + $0x60] sm:$0xff]
        %v395 = vld [vmem:[#allocation2 + $0x68] sm:$0xff]
        %v396 = vld [vmem:[#allocation2 + $0x70] sm:$0xff]
        %v397 = vld [vmem:[#allocation2 + $0x78] sm:$0xff]
        %v398 = vld [vmem:[#allocation2 + $0x80] sm:$0xff]
        %v399 = vld [vmem:[#allocation2 + $0x88] sm:$0xff]
        %v400 = vld [vmem:[#allocation2 + $0x90] sm:$0xff]
        %v401 = vld [vmem:[#allocation2 + $0x98] sm:$0xff]
        %v402 = vld [vmem:[#allocation2 + $0xa0] sm:$0xff]
        %v403 = vld [vmem:[#allocation2 + $0xa8] sm:$0xff]
        %v404 = vld [vmem:[#allocation2 + $0xb0] sm:$0xff]
        %v405 = vld [vmem:[#allocation2 + $0xb8] sm:$0xff]
        %v406 = vld [vmem:[#allocation2 + $0xc0] sm:$0xff]
        %v407 = vld [vmem:[#allocation2 + $0xc8] sm:$0xff]
        %v408 = vld [vmem:[#allocation2 + $0xd0] sm:$0xff]
        %v409 = vld [vmem:[#allocation2 + $0xd8] sm:$0xff]
        %v410 = vld [vmem:[#allocation2 + $0xe0] sm:$0xff]
        %v411 = vld [vmem:[#allocation2 + $0xe8] sm:$0xff]
        %v412 = vld [vmem:[#allocation2 + $0xf0] sm:$0xff]
        %v413 = vld [vmem:[#allocation2 + $0xf8] sm:$0xff]
        %v414 = vld [vmem:[%s258] sm:$0xff]
        %v415 = vld [vmem:[%s258 + $0x8] sm:$0xff]
        %v416 = vld [vmem:[%s258 + $0x10] sm:$0xff]
        %v417 = vld [vmem:[%s258 + $0x18] sm:$0xff]
        %v418 = vld [vmem:[%s258 + $0x20] sm:$0xff]
        %v419 = vld [vmem:[%s258 + $0x28] sm:$0xff]
        %v420 = vld [vmem:[%s258 + $0x30] sm:$0xff]
        %v421 = vld [vmem:[%s258 + $0x38] sm:$0xff]
        %v422 = vld [vmem:[%s258 + $0x40] sm:$0xff]
        %v423 = vld [vmem:[%s258 + $0x48] sm:$0xff]
        %v424 = vld [vmem:[%s258 + $0x50] sm:$0xff]
        %v425 = vld [vmem:[%s258 + $0x58] sm:$0xff]
        %v426 = vld [vmem:[%s258 + $0x60] sm:$0xff]
        %v427 = vld [vmem:[%s258 + $0x68] sm:$0xff]
        %v428 = vld [vmem:[%s258 + $0x70] sm:$0xff]
        %v429 = vld [vmem:[%s258 + $0x78] sm:$0xff]
        %v430 = vld [vmem:[%s258 + $0x80] sm:$0xff]
        %v431 = vld [vmem:[%s258 + $0x88] sm:$0xff]
        %v432 = vld [vmem:[%s258 + $0x90] sm:$0xff]
        %v433 = vld [vmem:[%s258 + $0x98] sm:$0xff]
        %v434 = vld [vmem:[%s258 + $0xa0] sm:$0xff]
        %v435 = vld [vmem:[%s258 + $0xa8] sm:$0xff]
        %v436 = vld [vmem:[%s258 + $0xb0] sm:$0xff]
        %v437 = vld [vmem:[%s258 + $0xb8] sm:$0xff]
        %v438 = vld [vmem:[%s258 + $0xc0] sm:$0xff]
        %v439 = vld [vmem:[%s258 + $0xc8] sm:$0xff]
        %v440 = vld [vmem:[%s258 + $0xd0] sm:$0xff]
        %v441 = vld [vmem:[%s258 + $0xd8] sm:$0xff]
        %v442 = vld [vmem:[%s258 + $0xe0] sm:$0xff]
        %v443 = vld [vmem:[%s258 + $0xe8] sm:$0xff]
        %v444 = vld [vmem:[%s258 + $0xf0] sm:$0xff]
        %v445 = vld [vmem:[%s258 + $0xf8] sm:$0xff]
        %v446 = vld [vmem:[%s258 + $0x100] sm:$0xff]
        %v447 = vld [vmem:[%s258 + $0x108] sm:$0xff]
        %v448 = vld [vmem:[%s258 + $0x110] sm:$0xff]
        %v449 = vld [vmem:[%s258 + $0x118] sm:$0xff]
        %v450 = vld [vmem:[%s258 + $0x120] sm:$0xff]
        %v451 = vld [vmem:[%s258 + $0x128] sm:$0xff]
        %v452 = vld [vmem:[%s258 + $0x130] sm:$0xff]
        %v453 = vld [vmem:[%s258 + $0x138] sm:$0xff]
        %v454 = vld [vmem:[%s258 + $0x140] sm:$0xff]
        %v455 = vld [vmem:[%s258 + $0x148] sm:$0xff]
        %v456 = vld [vmem:[%s258 + $0x150] sm:$0xff]
        %v457 = vld [vmem:[%s258 + $0x158] sm:$0xff]
        %v458 = vld [vmem:[%s258 + $0x160] sm:$0xff]
        %v459 = vld [vmem:[%s258 + $0x168] sm:$0xff]
        %v460 = vld [vmem:[%s258 + $0x170] sm:$0xff]
        %v461 = vld [vmem:[%s258 + $0x178] sm:$0xff]
        %v462 = vld [vmem:[%s258 + $0x180] sm:$0xff]
        %v463 = vld [vmem:[%s258 + $0x188] sm:$0xff]
        %v464 = vld [vmem:[%s258 + $0x190] sm:$0xff]
        %v465 = vld [vmem:[%s258 + $0x198] sm:$0xff]
        %v466 = vld [vmem:[%s258 + $0x1a0] sm:$0xff]
        %v467 = vld [vmem:[%s258 + $0x1a8] sm:$0xff]
        %v468 = vld [vmem:[%s258 + $0x1b0] sm:$0xff]
        %v469 = vld [vmem:[%s258 + $0x1b8] sm:$0xff]
        %v470 = vld [vmem:[%s258 + $0x1c0] sm:$0xff]
        %v471 = vld [vmem:[%s258 + $0x1c8] sm:$0xff]
        %v472 = vld [vmem:[%s258 + $0x1d0] sm:$0xff]
        %v473 = vld [vmem:[%s258 + $0x1d8] sm:$0xff]
        %v474 = vld [vmem:[%s258 + $0x1e0] sm:$0xff]
        %v475 = vld [vmem:[%s258 + $0x1e8] sm:$0xff]
        %v476 = vld [vmem:[%s258 + $0x1f0] sm:$0xff]
        %v477 = vld [vmem:[%s258 + $0x1f8] sm:$0xff]
        %v542 = vunpack.c.l.b16 %v414
        %v543 = vunpack.c.h.b16 %v414
        %v544 = vunpack.c.l.b16 %v415
        %v545 = vunpack.c.h.b16 %v415
        %v546 = vunpack.c.l.b16 %v416
        %v547 = vunpack.c.h.b16 %v416
        %v548 = vunpack.c.l.b16 %v417
        %v549 = vunpack.c.h.b16 %v417
        %v550 = vunpack.c.l.b16 %v418
        %v551 = vunpack.c.h.b16 %v418
        %v552 = vunpack.c.l.b16 %v419
        %v553 = vunpack.c.h.b16 %v419
        %v554 = vunpack.c.l.b16 %v420
        %v555 = vunpack.c.h.b16 %v420
        %v556 = vunpack.c.l.b16 %v421
        %v557 = vunpack.c.h.b16 %v421
        %v558 = vunpack.c.l.b16 %v422
        %v559 = vunpack.c.h.b16 %v422
        %v560 = vunpack.c.l.b16 %v423
        %v561 = vunpack.c.h.b16 %v423
        %v562 = vunpack.c.l.b16 %v424
        %v563 = vunpack.c.h.b16 %v424
        %v564 = vunpack.c.l.b16 %v425
        %v565 = vunpack.c.h.b16 %v425
        %v566 = vunpack.c.l.b16 %v426
        %v567 = vunpack.c.h.b16 %v426
        %v568 = vunpack.c.l.b16 %v427
        %v569 = vunpack.c.h.b16 %v427
        %v570 = vunpack.c.l.b16 %v428
        %v571 = vunpack.c.h.b16 %v428
        %v572 = vunpack.c.l.b16 %v429
        %v573 = vunpack.c.h.b16 %v429
        %v574 = vunpack.c.l.b16 %v430
        %v575 = vunpack.c.h.b16 %v430
        %v576 = vunpack.c.l.b16 %v431
        %v577 = vunpack.c.h.b16 %v431
        %v578 = vunpack.c.l.b16 %v432
        %v579 = vunpack.c.h.b16 %v432
        %v580 = vunpack.c.l.b16 %v433
        %v581 = vunpack.c.h.b16 %v433
        %v582 = vunpack.c.l.b16 %v434
        %v583 = vunpack.c.h.b16 %v434
        %v584 = vunpack.c.l.b16 %v435
        %v585 = vunpack.c.h.b16 %v435
        %v586 = vunpack.c.l.b16 %v436
        %v587 = vunpack.c.h.b16 %v436
        %v588 = vunpack.c.l.b16 %v437
        %v589 = vunpack.c.h.b16 %v437
        %v590 = vunpack.c.l.b16 %v438
        %v591 = vunpack.c.h.b16 %v438
        %v592 = vunpack.c.l.b16 %v439
        %v593 = vunpack.c.h.b16 %v439
        %v594 = vunpack.c.l.b16 %v440
        %v595 = vunpack.c.h.b16 %v440
        %v596 = vunpack.c.l.b16 %v441
        %v597 = vunpack.c.h.b16 %v441
        %v598 = vunpack.c.l.b16 %v442
        %v599 = vunpack.c.h.b16 %v442
        %v600 = vunpack.c.l.b16 %v443
        %v601 = vunpack.c.h.b16 %v443
        %v602 = vunpack.c.l.b16 %v444
        %v603 = vunpack.c.h.b16 %v444
        %v604 = vunpack.c.l.b16 %v445
        %v605 = vunpack.c.h.b16 %v445
        %v606 = vunpack.c.l.b16 %v446
        %v607 = vunpack.c.h.b16 %v446
        %v608 = vunpack.c.l.b16 %v447
        %v609 = vunpack.c.h.b16 %v447
        %v610 = vunpack.c.l.b16 %v448
        %v611 = vunpack.c.h.b16 %v448
        %v612 = vunpack.c.l.b16 %v449
        %v613 = vunpack.c.h.b16 %v449
        %v614 = vunpack.c.l.b16 %v450
        %v615 = vunpack.c.h.b16 %v450
        %v616 = vunpack.c.l.b16 %v451
        %v617 = vunpack.c.h.b16 %v451
        %v618 = vunpack.c.l.b16 %v452
        %v619 = vunpack.c.h.b16 %v452
        %v620 = vunpack.c.l.b16 %v453
        %v621 = vunpack.c.h.b16 %v453
        %v622 = vunpack.c.l.b16 %v454
        %v623 = vunpack.c.h.b16 %v454
        %v624 = vunpack.c.l.b16 %v455
        %v625 = vunpack.c.h.b16 %v455
        %v626 = vunpack.c.l.b16 %v456
        %v627 = vunpack.c.h.b16 %v456
        %v628 = vunpack.c.l.b16 %v457
        %v629 = vunpack.c.h.b16 %v457
        %v630 = vunpack.c.l.b16 %v458
        %v631 = vunpack.c.h.b16 %v458
        %v632 = vunpack.c.l.b16 %v459
        %v633 = vunpack.c.h.b16 %v459
        %v634 = vunpack.c.l.b16 %v460
        %v635 = vunpack.c.h.b16 %v460
        %v636 = vunpack.c.l.b16 %v461
        %v637 = vunpack.c.h.b16 %v461
        %v638 = vunpack.c.l.b16 %v462
        %v639 = vunpack.c.h.b16 %v462
        %v640 = vunpack.c.l.b16 %v463
        %v641 = vunpack.c.h.b16 %v463
        %v642 = vunpack.c.l.b16 %v464
        %v643 = vunpack.c.h.b16 %v464
        %v644 = vunpack.c.l.b16 %v465
        %v645 = vunpack.c.h.b16 %v465
        %v646 = vunpack.c.l.b16 %v466
        %v647 = vunpack.c.h.b16 %v466
        %v648 = vunpack.c.l.b16 %v467
        %v649 = vunpack.c.h.b16 %v467
        %v650 = vunpack.c.l.b16 %v468
        %v651 = vunpack.c.h.b16 %v468
        %v652 = vunpack.c.l.b16 %v469
        %v653 = vunpack.c.h.b16 %v469
        %v654 = vunpack.c.l.b16 %v470
        %v655 = vunpack.c.h.b16 %v470
        %v656 = vunpack.c.l.b16 %v471
        %v657 = vunpack.c.h.b16 %v471
        %v658 = vunpack.c.l.b16 %v472
        %v659 = vunpack.c.h.b16 %v472
        %v660 = vunpack.c.l.b16 %v473
        %v661 = vunpack.c.h.b16 %v473
        %v662 = vunpack.c.l.b16 %v474
        %v663 = vunpack.c.h.b16 %v474
        %v664 = vunpack.c.l.b16 %v475
        %v665 = vunpack.c.h.b16 %v475
        %v666 = vunpack.c.l.b16 %v476
        %v667 = vunpack.c.h.b16 %v476
        %v668 = vunpack.c.l.b16 %v477
        %v669 = vunpack.c.h.b16 %v477
        %v670 = vpack.c.b16 %v546, %v542
        %v671 = vpack.c.b16 %v547, %v543
        %v672 = vpack.c.b16 %v548, %v544
        %v673 = vpack.c.b16 %v549, %v545
        %v674 = vpack.c.b16 %v554, %v550
        %v675 = vpack.c.b16 %v555, %v551
        %v676 = vpack.c.b16 %v556, %v552
        %v677 = vpack.c.b16 %v557, %v553
        %v678 = vpack.c.b16 %v562, %v558
        %v679 = vpack.c.b16 %v563, %v559
        %v680 = vpack.c.b16 %v564, %v560
        %v681 = vpack.c.b16 %v565, %v561
        %v682 = vpack.c.b16 %v570, %v566
        %v683 = vpack.c.b16 %v571, %v567
        %v684 = vpack.c.b16 %v572, %v568
        %v685 = vpack.c.b16 %v573, %v569
        %v686 = vpack.c.b16 %v578, %v574
        %v687 = vpack.c.b16 %v579, %v575
        %v688 = vpack.c.b16 %v580, %v576
        %v689 = vpack.c.b16 %v581, %v577
        %v690 = vpack.c.b16 %v586, %v582
        %v691 = vpack.c.b16 %v587, %v583
        %v692 = vpack.c.b16 %v588, %v584
        %v693 = vpack.c.b16 %v589, %v585
        %v694 = vpack.c.b16 %v594, %v590
        %v695 = vpack.c.b16 %v595, %v591
        %v696 = vpack.c.b16 %v596, %v592
        %v697 = vpack.c.b16 %v597, %v593
        %v698 = vpack.c.b16 %v602, %v598
        %v699 = vpack.c.b16 %v603, %v599
        %v700 = vpack.c.b16 %v604, %v600
        %v701 = vpack.c.b16 %v605, %v601
        %v702 = vpack.c.b16 %v610, %v606
        %v703 = vpack.c.b16 %v611, %v607
        %v704 = vpack.c.b16 %v612, %v608
        %v705 = vpack.c.b16 %v613, %v609
        %v706 = vpack.c.b16 %v618, %v614
        %v707 = vpack.c.b16 %v619, %v615
        %v708 = vpack.c.b16 %v620, %v616
        %v709 = vpack.c.b16 %v621, %v617
        %v710 = vpack.c.b16 %v626, %v622
        %v711 = vpack.c.b16 %v627, %v623
        %v712 = vpack.c.b16 %v628, %v624
        %v713 = vpack.c.b16 %v629, %v625
        %v714 = vpack.c.b16 %v634, %v630
        %v715 = vpack.c.b16 %v635, %v631
        %v716 = vpack.c.b16 %v636, %v632
        %v717 = vpack.c.b16 %v637, %v633
        %v718 = vpack.c.b16 %v642, %v638
        %v719 = vpack.c.b16 %v643, %v639
        %v720 = vpack.c.b16 %v644, %v640
        %v721 = vpack.c.b16 %v645, %v641
        %v722 = vpack.c.b16 %v650, %v646
        %v723 = vpack.c.b16 %v651, %v647
        %v724 = vpack.c.b16 %v652, %v648
        %v725 = vpack.c.b16 %v653, %v649
        %v726 = vpack.c.b16 %v658, %v654
        %v727 = vpack.c.b16 %v659, %v655
        %v728 = vpack.c.b16 %v660, %v656
        %v729 = vpack.c.b16 %v661, %v657
        %v730 = vpack.c.b16 %v666, %v662
        %v731 = vpack.c.b16 %v667, %v663
        %v732 = vpack.c.b16 %v668, %v664
        %v733 = vpack.c.b16 %v669, %v665
        %v862 = vunpack.c.l.b16 %v318
        %v863 = vunpack.c.l.b16 %v319
        %v864 = vunpack.c.l.b16 %v320
        %v865 = vunpack.c.l.b16 %v321
        %v866 = vunpack.c.l.b16 %v322
        %v867 = vunpack.c.l.b16 %v323
        %v868 = vunpack.c.l.b16 %v324
        %v869 = vunpack.c.l.b16 %v325
        %v870 = vunpack.c.l.b16 %v326
        %v871 = vunpack.c.l.b16 %v327
        %v872 = vunpack.c.l.b16 %v328
        %v873 = vunpack.c.l.b16 %v329
        %v874 = vunpack.c.l.b16 %v330
        %v875 = vunpack.c.l.b16 %v331
        %v876 = vunpack.c.l.b16 %v332
        %v877 = vunpack.c.l.b16 %v333
        %v878 = vunpack.c.l.b16 %v334
        %v879 = vunpack.c.l.b16 %v335
        %v880 = vunpack.c.l.b16 %v336
        %v881 = vunpack.c.l.b16 %v337
        %v882 = vunpack.c.l.b16 %v338
        %v883 = vunpack.c.l.b16 %v339
        %v884 = vunpack.c.l.b16 %v340
        %v885 = vunpack.c.l.b16 %v341
        %v886 = vunpack.c.l.b16 %v342
        %v887 = vunpack.c.l.b16 %v343
        %v888 = vunpack.c.l.b16 %v344
        %v889 = vunpack.c.l.b16 %v345
        %v890 = vunpack.c.l.b16 %v346
        %v891 = vunpack.c.l.b16 %v347
        %v892 = vunpack.c.l.b16 %v348
        %v893 = vunpack.c.l.b16 %v349
        %v894 = vunpack.c.l.b16 %v350
        %v895 = vunpack.c.l.b16 %v351
        %v896 = vunpack.c.l.b16 %v352
        %v897 = vunpack.c.l.b16 %v353
        %v898 = vunpack.c.l.b16 %v354
        %v899 = vunpack.c.l.b16 %v355
        %v900 = vunpack.c.l.b16 %v356
        %v901 = vunpack.c.l.b16 %v357
        %v902 = vunpack.c.l.b16 %v358
        %v903 = vunpack.c.l.b16 %v359
        %v904 = vunpack.c.l.b16 %v360
        %v905 = vunpack.c.l.b16 %v361
        %v906 = vunpack.c.l.b16 %v362
        %v907 = vunpack.c.l.b16 %v363
        %v908 = vunpack.c.l.b16 %v364
        %v909 = vunpack.c.l.b16 %v365
        %v910 = vunpack.c.l.b16 %v366
        %v911 = vunpack.c.l.b16 %v367
        %v912 = vunpack.c.l.b16 %v368
        %v913 = vunpack.c.l.b16 %v369
        %v914 = vunpack.c.l.b16 %v370
        %v915 = vunpack.c.l.b16 %v371
        %v916 = vunpack.c.l.b16 %v372
        %v917 = vunpack.c.l.b16 %v373
        %v918 = vunpack.c.l.b16 %v374
        %v919 = vunpack.c.l.b16 %v375
        %v920 = vunpack.c.l.b16 %v376
        %v921 = vunpack.c.l.b16 %v377
        %v922 = vunpack.c.l.b16 %v378
        %v923 = vunpack.c.l.b16 %v379
        %v924 = vunpack.c.l.b16 %v380
        %v925 = vunpack.c.l.b16 %v381
        %v926 = vpack.c.b16 %v863, %v862
        %v927 = vpack.c.b16 %v865, %v864
        %v928 = vpack.c.b16 %v867, %v866
        %v929 = vpack.c.b16 %v869, %v868
        %v930 = vpack.c.b16 %v871, %v870
        %v931 = vpack.c.b16 %v873, %v872
        %v932 = vpack.c.b16 %v875, %v874
        %v933 = vpack.c.b16 %v877, %v876
        %v934 = vpack.c.b16 %v879, %v878
        %v935 = vpack.c.b16 %v881, %v880
        %v936 = vpack.c.b16 %v883, %v882
        %v937 = vpack.c.b16 %v885, %v884
        %v938 = vpack.c.b16 %v887, %v886
        %v939 = vpack.c.b16 %v889, %v888
        %v940 = vpack.c.b16 %v891, %v890
        %v941 = vpack.c.b16 %v893, %v892
        %v942 = vpack.c.b16 %v895, %v894
        %v943 = vpack.c.b16 %v897, %v896
        %v944 = vpack.c.b16 %v899, %v898
        %v945 = vpack.c.b16 %v901, %v900
        %v946 = vpack.c.b16 %v903, %v902
        %v947 = vpack.c.b16 %v905, %v904
        %v948 = vpack.c.b16 %v907, %v906
        %v949 = vpack.c.b16 %v909, %v908
        %v950 = vpack.c.b16 %v911, %v910
        %v951 = vpack.c.b16 %v913, %v912
        %v952 = vpack.c.b16 %v915, %v914
        %v953 = vpack.c.b16 %v917, %v916
        %v954 = vpack.c.b16 %v919, %v918
        %v955 = vpack.c.b16 %v921, %v920
        %v956 = vpack.c.b16 %v923, %v922
        %v957 = vpack.c.b16 %v925, %v924
        %990 = vmatprep.subr.bf16.mxu0 0
        %991 = vmatpush1.bf16.msra.mxu0 %v926
        %992 = vmatprep.subr.bf16.mxu0 0
        %993 = vmatpush1.bf16.msra.mxu0 %v927
        %994 = vmatprep.subr.bf16.mxu0 0
        %995 = vmatpush1.bf16.msra.mxu0 %v928
        %996 = vmatprep.subr.bf16.mxu0 0
        %997 = vmatpush1.bf16.msra.mxu0 %v929
        %998 = vmatprep.subr.bf16.mxu0 0
        %999 = vmatpush1.bf16.msra.mxu0 %v930
        %1000 = vmatprep.subr.bf16.mxu0 0
        %1001 = vmatpush1.bf16.msra.mxu0 %v931
        %1002 = vmatprep.subr.bf16.mxu0 0
        %1003 = vmatpush1.bf16.msra.mxu0 %v932
        %1004 = vmatprep.subr.bf16.mxu0 0
        %1005 = vmatpush1.bf16.msra.mxu0 %v933
        %1006 = vmatprep.subr.bf16.mxu0 0
        %1007 = vmatpush1.bf16.msra.mxu0 %v934
        %1008 = vmatprep.subr.bf16.mxu0 0
        %1009 = vmatpush1.bf16.msra.mxu0 %v935
        %1010 = vmatprep.subr.bf16.mxu0 0
        %1011 = vmatpush1.bf16.msra.mxu0 %v936
        %1012 = vmatprep.subr.bf16.mxu0 0
        %1013 = vmatpush1.bf16.msra.mxu0 %v937
        %1014 = vmatprep.subr.bf16.mxu0 0
        %1015 = vmatpush1.bf16.msra.mxu0 %v938
        %1016 = vmatprep.subr.bf16.mxu0 0
        %1017 = vmatpush1.bf16.msra.mxu0 %v939
        %1018 = vmatprep.subr.bf16.mxu0 0
        %1019 = vmatpush1.bf16.msra.mxu0 %v940
        %1020 = vmatprep.subr.bf16.mxu0 0
        %1021 = vmatpush1.bf16.msra.mxu0 %v941
        %1022 = vmatprep.mubr.bf16.mxu0 %v671
        %1023 = vmatmul.mubr.bf16.gmra.mrb[0].mxu0 %v670
        %v1024 = vpop.f32.mrb[0].mxu0
        %v1025 = vadd.f32 0.0, %v1024
        %v1026 = vpop.f32.mrb[0].mxu0
        %v1027 = vpop.f32.mrb[0].mxu0
        %v1028 = vadd.f32 0.0, %v1027
        %v1029 = vpop.f32.mrb[0].mxu0
        %1030 = vmatprep.mubr.bf16.mxu0 %v675
        %1031 = vmatmul.mubr.bf16.gmra.mrb[0].mxu0 %v674
        %v1032 = vpop.f32.mrb[0].mxu0
        %v1033 = vadd.f32 0.0, %v1032
        %v1034 = vpop.f32.mrb[0].mxu0
        %v1035 = vpop.f32.mrb[0].mxu0
        %v1036 = vadd.f32 0.0, %v1035
        %v1037 = vpop.f32.mrb[0].mxu0
        %1038 = vmatprep.mubr.bf16.mxu0 %v679
        %1039 = vmatmul.mubr.bf16.gmra.mrb[0].mxu0 %v678
        %v1040 = vpop.f32.mrb[0].mxu0
        %v1041 = vadd.f32 0.0, %v1040
        %v1042 = vpop.f32.mrb[0].mxu0
        %v1043 = vpop.f32.mrb[0].mxu0
        %v1044 = vadd.f32 0.0, %v1043
        %v1045 = vpop.f32.mrb[0].mxu0
        %1046 = vmatprep.mubr.bf16.mxu0 %v683
        %1047 = vmatmul.mubr.bf16.gmra.mrb[0].mxu0 %v682
        %v1048 = vpop.f32.mrb[0].mxu0
        %v1049 = vadd.f32 0.0, %v1048
        %v1050 = vpop.f32.mrb[0].mxu0
        %v1051 = vpop.f32.mrb[0].mxu0
        %v1052 = vadd.f32 0.0, %v1051
        %v1053 = vpop.f32.mrb[0].mxu0
        %1054 = vmatprep.mubr.bf16.mxu0 %v687
        %1055 = vmatmul.mubr.bf16.gmra.mrb[0].mxu0 %v686
        %v1056 = vpop.f32.mrb[0].mxu0
        %v1057 = vadd.f32 0.0, %v1056
        %v1058 = vpop.f32.mrb[0].mxu0
        %v1059 = vpop.f32.mrb[0].mxu0
        %v1060 = vadd.f32 0.0, %v1059
        %v1061 = vpop.f32.mrb[0].mxu0
        %1062 = vmatprep.mubr.bf16.mxu0 %v691
        %1063 = vmatmul.mubr.bf16.gmra.mrb[0].mxu0 %v690
        %v1064 = vpop.f32.mrb[0].mxu0
        %v1065 = vadd.f32 0.0, %v1064
        %v1066 = vpop.f32.mrb[0].mxu0
        %v1067 = vpop.f32.mrb[0].mxu0
        %v1068 = vadd.f32 0.0, %v1067
        %v1069 = vpop.f32.mrb[0].mxu0
        %1070 = vmatprep.mubr.bf16.mxu0 %v695
        %1071 = vmatmul.mubr.bf16.gmra.mrb[0].mxu0 %v694
        %v1072 = vpop.f32.mrb[0].mxu0
        %v1073 = vadd.f32 0.0, %v1072
        %v1074 = vpop.f32.mrb[0].mxu0
        %v1075 = vpop.f32.mrb[0].mxu0
        %v1076 = vadd.f32 0.0, %v1075
        %v1077 = vpop.f32.mrb[0].mxu0
        %1078 = vmatprep.mubr.bf16.mxu0 %v699
        %1079 = vmatmul.mubr.bf16.gmra.mrb[0].mxu0 %v698
        %v1080 = vpop.f32.mrb[0].mxu0
        %v1081 = vadd.f32 0.0, %v1080
        %v1082 = vpop.f32.mrb[0].mxu0
        %v1083 = vpop.f32.mrb[0].mxu0
        %v1084 = vadd.f32 0.0, %v1083
        %v1085 = vpop.f32.mrb[0].mxu0
        %1086 = vmatprep.mubr.bf16.mxu0 %v703
        %1087 = vmatmul.mubr.bf16.gmra.mrb[0].mxu0 %v702
        %v1088 = vpop.f32.mrb[0].mxu0
        %v1089 = vadd.f32 0.0, %v1088
        %v1090 = vpop.f32.mrb[0].mxu0
        %v1091 = vpop.f32.mrb[0].mxu0
        %v1092 = vadd.f32 0.0, %v1091
        %v1093 = vpop.f32.mrb[0].mxu0
        %1094 = vmatprep.mubr.bf16.mxu0 %v707
        %1095 = vmatmul.mubr.bf16.gmra.mrb[0].mxu0 %v706
        %v1096 = vpop.f32.mrb[0].mxu0
        %v1097 = vadd.f32 0.0, %v1096
        %v1098 = vpop.f32.mrb[0].mxu0
        %v1099 = vpop.f32.mrb[0].mxu0
        %v1100 = vadd.f32 0.0, %v1099
        %v1101 = vpop.f32.mrb[0].mxu0
        %1102 = vmatprep.mubr.bf16.mxu0 %v711
        %1103 = vmatmul.mubr.bf16.gmra.mrb[0].mxu0 %v710
        %v1104 = vpop.f32.mrb[0].mxu0
        %v1105 = vadd.f32 0.0, %v1104
        %v1106 = vpop.f32.mrb[0].mxu0
        %v1107 = vpop.f32.mrb[0].mxu0
        %v1108 = vadd.f32 0.0, %v1107
        %v1109 = vpop.f32.mrb[0].mxu0
        %1110 = vmatprep.mubr.bf16.mxu0 %v715
        %1111 = vmatmul.mubr.bf16.gmra.mrb[0].mxu0 %v714
        %v1112 = vpop.f32.mrb[0].mxu0
        %v1113 = vadd.f32 0.0, %v1112
        %v1114 = vpop.f32.mrb[0].mxu0
        %v1115 = vpop.f32.mrb[0].mxu0
        %v1116 = vadd.f32 0.0, %v1115
        %v1117 = vpop.f32.mrb[0].mxu0
        %1118 = vmatprep.mubr.bf16.mxu0 %v719
        %1119 = vmatmul.mubr.bf16.gmra.mrb[0].mxu0 %v718
        %v1120 = vpop.f32.mrb[0].mxu0
        %v1121 = vadd.f32 0.0, %v1120
        %v1122 = vpop.f32.mrb[0].mxu0
        %v1123 = vpop.f32.mrb[0].mxu0
        %v1124 = vadd.f32 0.0, %v1123
        %v1125 = vpop.f32.mrb[0].mxu0
        %1126 = vmatprep.mubr.bf16.mxu0 %v723
        %1127 = vmatmul.mubr.bf16.gmra.mrb[0].mxu0 %v722
        %v1128 = vpop.f32.mrb[0].mxu0
        %v1129 = vadd.f32 0.0, %v1128
        %v1130 = vpop.f32.mrb[0].mxu0
        %v1131 = vpop.f32.mrb[0].mxu0
        %v1132 = vadd.f32 0.0, %v1131
        %v1133 = vpop.f32.mrb[0].mxu0
        %1134 = vmatprep.mubr.bf16.mxu0 %v727
        %1135 = vmatmul.mubr.bf16.gmra.mrb[0].mxu0 %v726
        %v1136 = vpop.f32.mrb[0].mxu0
        %v1137 = vadd.f32 0.0, %v1136
        %v1138 = vpop.f32.mrb[0].mxu0
        %v1139 = vpop.f32.mrb[0].mxu0
        %v1140 = vadd.f32 0.0, %v1139
        %v1141 = vpop.f32.mrb[0].mxu0
        %1142 = vmatprep.mubr.bf16.mxu0 %v731
        %1143 = vmatmul.mubr.bf16.gmra.mrb[0].mxu0 %v730
        %v1144 = vpop.f32.mrb[0].mxu0
        %v1145 = vadd.f32 0.0, %v1144
        %v1146 = vpop.f32.mrb[0].mxu0
        %v1147 = vpop.f32.mrb[0].mxu0
        %v1148 = vadd.f32 0.0, %v1147
        %v1149 = vpop.f32.mrb[0].mxu0
        %1150 = vdwg.mxu0
        %1151 = vmatprep.subr.bf16.mxu0 0
        %1152 = vmatpush1.bf16.msra.mxu0 %v942
        %1153 = vmatprep.subr.bf16.mxu0 0
        %1154 = vmatpush1.bf16.msra.mxu0 %v943
        %1155 = vmatprep.subr.bf16.mxu0 0
        %1156 = vmatpush1.bf16.msra.mxu0 %v944
        %1157 = vmatprep.subr.bf16.mxu0 0
        %1158 = vmatpush1.bf16.msra.mxu0 %v945
        %1159 = vmatprep.subr.bf16.mxu0 0
        %1160 = vmatpush1.bf16.msra.mxu0 %v946
        %1161 = vmatprep.subr.bf16.mxu0 0
        %1162 = vmatpush1.bf16.msra.mxu0 %v947
        %1163 = vmatprep.subr.bf16.mxu0 0
        %1164 = vmatpush1.bf16.msra.mxu0 %v948
        %1165 = vmatprep.subr.bf16.mxu0 0
        %1166 = vmatpush1.bf16.msra.mxu0 %v949
        %1167 = vmatprep.subr.bf16.mxu0 0
        %1168 = vmatpush1.bf16.msra.mxu0 %v950
        %1169 = vmatprep.subr.bf16.mxu0 0
        %1170 = vmatpush1.bf16.msra.mxu0 %v951
        %1171 = vmatprep.subr.bf16.mxu0 0
        %1172 = vmatpush1.bf16.msra.mxu0 %v952
        %1173 = vmatprep.subr.bf16.mxu0 0
        %1174 = vmatpush1.bf16.msra.mxu0 %v953
        %1175 = vmatprep.subr.bf16.mxu0 0
        %1176 = vmatpush1.bf16.msra.mxu0 %v954
        %1177 = vmatprep.subr.bf16.mxu0 0
        %1178 = vmatpush1.bf16.msra.mxu0 %v955
        %1179 = vmatprep.subr.bf16.mxu0 0
        %1180 = vmatpush1.bf16.msra.mxu0 %v956
        %1181 = vmatprep.subr.bf16.mxu0 0
        %1182 = vmatpush1.bf16.msra.mxu0 %v957
        %1183 = vmatprep.mubr.bf16.mxu0 %v673
        %1184 = vmatmul.mubr.bf16.gmra.mrb[0].mxu0 %v672
        %v1185 = vpop.f32.mrb[0].mxu0
        %v1186 = vadd.f32 %v1025, %v1185
        %v1187 = vpop.f32.mrb[0].mxu0
        %v1188 = vpop.f32.mrb[0].mxu0
        %v1189 = vadd.f32 %v1028, %v1188
        %v1190 = vpop.f32.mrb[0].mxu0
        %1191 = vmatprep.mubr.bf16.mxu0 %v677
        %1192 = vmatmul.mubr.bf16.gmra.mrb[0].mxu0 %v676
        %v1193 = vpop.f32.mrb[0].mxu0
        %v1194 = vadd.f32 %v1033, %v1193
        %v1195 = vpop.f32.mrb[0].mxu0
        %v1196 = vpop.f32.mrb[0].mxu0
        %v1197 = vadd.f32 %v1036, %v1196
        %v1198 = vpop.f32.mrb[0].mxu0
        %1199 = vmatprep.mubr.bf16.mxu0 %v681
        %1200 = vmatmul.mubr.bf16.gmra.mrb[0].mxu0 %v680
        %v1201 = vpop.f32.mrb[0].mxu0
        %v1202 = vadd.f32 %v1041, %v1201
        %v1203 = vpop.f32.mrb[0].mxu0
        %v1204 = vpop.f32.mrb[0].mxu0
        %v1205 = vadd.f32 %v1044, %v1204
        %v1206 = vpop.f32.mrb[0].mxu0
        %1207 = vmatprep.mubr.bf16.mxu0 %v685
        %1208 = vmatmul.mubr.bf16.gmra.mrb[0].mxu0 %v684
        %v1209 = vpop.f32.mrb[0].mxu0
        %v1210 = vadd.f32 %v1049, %v1209
        %v1211 = vpop.f32.mrb[0].mxu0
        %v1212 = vpop.f32.mrb[0].mxu0
        %v1213 = vadd.f32 %v1052, %v1212
        %v1214 = vpop.f32.mrb[0].mxu0
        %1215 = vmatprep.mubr.bf16.mxu0 %v689
        %1216 = vmatmul.mubr.bf16.gmra.mrb[0].mxu0 %v688
        %v1217 = vpop.f32.mrb[0].mxu0
        %v1218 = vadd.f32 %v1057, %v1217
        %v1219 = vpop.f32.mrb[0].mxu0
        %v1220 = vpop.f32.mrb[0].mxu0
        %v1221 = vadd.f32 %v1060, %v1220
        %v1222 = vpop.f32.mrb[0].mxu0
        %1223 = vmatprep.mubr.bf16.mxu0 %v693
        %1224 = vmatmul.mubr.bf16.gmra.mrb[0].mxu0 %v692
        %v1225 = vpop.f32.mrb[0].mxu0
        %v1226 = vadd.f32 %v1065, %v1225
        %v1227 = vpop.f32.mrb[0].mxu0
        %v1228 = vpop.f32.mrb[0].mxu0
        %v1229 = vadd.f32 %v1068, %v1228
        %v1230 = vpop.f32.mrb[0].mxu0
        %1231 = vmatprep.mubr.bf16.mxu0 %v697
        %1232 = vmatmul.mubr.bf16.gmra.mrb[0].mxu0 %v696
        %v1233 = vpop.f32.mrb[0].mxu0
        %v1234 = vadd.f32 %v1073, %v1233
        %v1235 = vpop.f32.mrb[0].mxu0
        %v1236 = vpop.f32.mrb[0].mxu0
        %v1237 = vadd.f32 %v1076, %v1236
        %v1238 = vpop.f32.mrb[0].mxu0
        %1239 = vmatprep.mubr.bf16.mxu0 %v701
        %1240 = vmatmul.mubr.bf16.gmra.mrb[0].mxu0 %v700
        %v1241 = vpop.f32.mrb[0].mxu0
        %v1242 = vadd.f32 %v1081, %v1241
        %v1243 = vpop.f32.mrb[0].mxu0
        %v1244 = vpop.f32.mrb[0].mxu0
        %v1245 = vadd.f32 %v1084, %v1244
        %v1246 = vpop.f32.mrb[0].mxu0
        %1247 = vmatprep.mubr.bf16.mxu0 %v705
        %1248 = vmatmul.mubr.bf16.gmra.mrb[0].mxu0 %v704
        %v1249 = vpop.f32.mrb[0].mxu0
        %v1250 = vadd.f32 %v1089, %v1249
        %v1251 = vpop.f32.mrb[0].mxu0
        %v1252 = vpop.f32.mrb[0].mxu0
        %v1253 = vadd.f32 %v1092, %v1252
        %v1254 = vpop.f32.mrb[0].mxu0
        %1255 = vmatprep.mubr.bf16.mxu0 %v709
        %1256 = vmatmul.mubr.bf16.gmra.mrb[0].mxu0 %v708
        %v1257 = vpop.f32.mrb[0].mxu0
        %v1258 = vadd.f32 %v1097, %v1257
        %v1259 = vpop.f32.mrb[0].mxu0
        %v1260 = vpop.f32.mrb[0].mxu0
        %v1261 = vadd.f32 %v1100, %v1260
        %v1262 = vpop.f32.mrb[0].mxu0
        %1263 = vmatprep.mubr.bf16.mxu0 %v713
        %1264 = vmatmul.mubr.bf16.gmra.mrb[0].mxu0 %v712
        %v1265 = vpop.f32.mrb[0].mxu0
        %v1266 = vadd.f32 %v1105, %v1265
        %v1267 = vpop.f32.mrb[0].mxu0
        %v1268 = vpop.f32.mrb[0].mxu0
        %v1269 = vadd.f32 %v1108, %v1268
        %v1270 = vpop.f32.mrb[0].mxu0
        %1271 = vmatprep.mubr.bf16.mxu0 %v717
        %1272 = vmatmul.mubr.bf16.gmra.mrb[0].mxu0 %v716
        %v1273 = vpop.f32.mrb[0].mxu0
        %v1274 = vadd.f32 %v1113, %v1273
        %v1275 = vpop.f32.mrb[0].mxu0
        %v1276 = vpop.f32.mrb[0].mxu0
        %v1277 = vadd.f32 %v1116, %v1276
        %v1278 = vpop.f32.mrb[0].mxu0
        %1279 = vmatprep.mubr.bf16.mxu0 %v721
        %1280 = vmatmul.mubr.bf16.gmra.mrb[0].mxu0 %v720
        %v1281 = vpop.f32.mrb[0].mxu0
        %v1282 = vadd.f32 %v1121, %v1281
        %v1283 = vpop.f32.mrb[0].mxu0
        %v1284 = vpop.f32.mrb[0].mxu0
        %v1285 = vadd.f32 %v1124, %v1284
        %v1286 = vpop.f32.mrb[0].mxu0
        %1287 = vmatprep.mubr.bf16.mxu0 %v725
        %1288 = vmatmul.mubr.bf16.gmra.mrb[0].mxu0 %v724
        %v1289 = vpop.f32.mrb[0].mxu0
        %v1290 = vadd.f32 %v1129, %v1289
        %v1291 = vpop.f32.mrb[0].mxu0
        %v1292 = vpop.f32.mrb[0].mxu0
        %v1293 = vadd.f32 %v1132, %v1292
        %v1294 = vpop.f32.mrb[0].mxu0
        %1295 = vmatprep.mubr.bf16.mxu0 %v729
        %1296 = vmatmul.mubr.bf16.gmra.mrb[0].mxu0 %v728
        %v1297 = vpop.f32.mrb[0].mxu0
        %v1298 = vadd.f32 %v1137, %v1297
        %v1299 = vpop.f32.mrb[0].mxu0
        %v1300 = vpop.f32.mrb[0].mxu0
        %v1301 = vadd.f32 %v1140, %v1300
        %v1302 = vpop.f32.mrb[0].mxu0
        %1303 = vmatprep.mubr.bf16.mxu0 %v733
        %1304 = vmatmul.mubr.bf16.gmra.mrb[0].mxu0 %v732
        %v1305 = vpop.f32.mrb[0].mxu0
        %v1306 = vadd.f32 %v1145, %v1305
        %v1307 = vpop.f32.mrb[0].mxu0
        %v1308 = vpop.f32.mrb[0].mxu0
        %v1309 = vadd.f32 %v1148, %v1308
        %v1310 = vpop.f32.mrb[0].mxu0
        %1311 = vdwg.mxu0
        %v1312 = vadd.f32 %v382, %v1186
        %v1313 = vadd.f32 %v383, %v1189
        %v1314 = vadd.f32 %v384, %v1194
        %v1315 = vadd.f32 %v385, %v1197
        %v1316 = vadd.f32 %v386, %v1202
        %v1317 = vadd.f32 %v387, %v1205
        %v1318 = vadd.f32 %v388, %v1210
        %v1319 = vadd.f32 %v389, %v1213
        %v1320 = vadd.f32 %v390, %v1218
        %v1321 = vadd.f32 %v391, %v1221
        %v1322 = vadd.f32 %v392, %v1226
        %v1323 = vadd.f32 %v393, %v1229
        %v1324 = vadd.f32 %v394, %v1234
        %v1325 = vadd.f32 %v395, %v1237
        %v1326 = vadd.f32 %v396, %v1242
        %v1327 = vadd.f32 %v397, %v1245
        %v1328 = vadd.f32 %v398, %v1250
        %v1329 = vadd.f32 %v399, %v1253
        %v1330 = vadd.f32 %v400, %v1258
        %v1331 = vadd.f32 %v401, %v1261
        %v1332 = vadd.f32 %v402, %v1266
        %v1333 = vadd.f32 %v403, %v1269
        %v1334 = vadd.f32 %v404, %v1274
        %v1335 = vadd.f32 %v405, %v1277
        %v1336 = vadd.f32 %v406, %v1282
        %v1337 = vadd.f32 %v407, %v1285
        %v1338 = vadd.f32 %v408, %v1290
        %v1339 = vadd.f32 %v409, %v1293
        %v1340 = vadd.f32 %v410, %v1298
        %v1341 = vadd.f32 %v411, %v1301
        %v1342 = vadd.f32 %v412, %v1306
        %v1343 = vadd.f32 %v413, %v1309
        %1344 = vst [vmem:[#allocation2] sm:$0xff] %v1312
        %1345 = vst [vmem:[#allocation2 + $0x8] sm:$0xff] %v1313
        %1346 = vst [vmem:[#allocation2 + $0x10] sm:$0xff] %v1314
        %1347 = vst [vmem:[#allocation2 + $0x18] sm:$0xff] %v1315
        %1348 = vst [vmem:[#allocation2 + $0x20] sm:$0xff] %v1316
        %1349 = vst [vmem:[#allocation2 + $0x28] sm:$0xff] %v1317
        %1350 = vst [vmem:[#allocation2 + $0x30] sm:$0xff] %v1318
        %1351 = vst [vmem:[#allocation2 + $0x38] sm:$0xff] %v1319
        %1352 = vst [vmem:[#allocation2 + $0x40] sm:$0xff] %v1320
        %1353 = vst [vmem:[#allocation2 + $0x48] sm:$0xff] %v1321
        %1354 = vst [vmem:[#allocation2 + $0x50] sm:$0xff] %v1322
        %1355 = vst [vmem:[#allocation2 + $0x58] sm:$0xff] %v1323
        %1356 = vst [vmem:[#allocation2 + $0x60] sm:$0xff] %v1324
        %1357 = vst [vmem:[#allocation2 + $0x68] sm:$0xff] %v1325
        %1358 = vst [vmem:[#allocation2 + $0x70] sm:$0xff] %v1326
        %1359 = vst [vmem:[#allocation2 + $0x78] sm:$0xff] %v1327
        %1360 = vst [vmem:[#allocation2 + $0x80] sm:$0xff] %v1328
        %1361 = vst [vmem:[#allocation2 + $0x88] sm:$0xff] %v1329
        %1362 = vst [vmem:[#allocation2 + $0x90] sm:$0xff] %v1330
        %1363 = vst [vmem:[#allocation2 + $0x98] sm:$0xff] %v1331
        %1364 = vst [vmem:[#allocation2 + $0xa0] sm:$0xff] %v1332
        %1365 = vst [vmem:[#allocation2 + $0xa8] sm:$0xff] %v1333
        %1366 = vst [vmem:[#allocation2 + $0xb0] sm:$0xff] %v1334
        %1367 = vst [vmem:[#allocation2 + $0xb8] sm:$0xff] %v1335
        %1368 = vst [vmem:[#allocation2 + $0xc0] sm:$0xff] %v1336
        %1369 = vst [vmem:[#allocation2 + $0xc8] sm:$0xff] %v1337
        %1370 = vst [vmem:[#allocation2 + $0xd0] sm:$0xff] %v1338
        %1371 = vst [vmem:[#allocation2 + $0xd8] sm:$0xff] %v1339
        %1372 = vst [vmem:[#allocation2 + $0xe0] sm:$0xff] %v1340
        %1373 = vst [vmem:[#allocation2 + $0xe8] sm:$0xff] %v1341
        %1374 = vst [vmem:[#allocation2 + $0xf0] sm:$0xff] %v1342
        %1375 = vst [vmem:[#allocation2 + $0xf8] sm:$0xff] %v1343
      $region44: #{gcn_unit_forward.1} parent=35 // pred_fallthru
        _
      // Predicated region
      $region45: #{gcn_unit_forward.1} parent=35 // pred_check
        %p1376 = pneg %p271
      $region46: #{gcn_unit_forward.1} parent=35 // pred_check_branch
        %1378 = sbr.rel (%p1376) target = $region48
      $region47: #{gcn_unit_forward.1} parent=35 // pred_region
        %s1379 = smul.u32 %s36, 256
        %s1380 = sshra.s32 %s1379, 3
        %s1381 = sand.u32 %s1379, 7
        %s1382 = smul.addr %s1380, 4
        %s1383 = scalar_lea.vmem %s4, %s1382
        %v1384 = vld [vmem:[%s1383] sm:$0xf]
        %v1385 = vld [vmem:[%s1383 + $0x4] sm:$0xf]
        %v1386 = vld [vmem:[%s1383 + $0x8] sm:$0xf]
        %v1387 = vld [vmem:[%s1383 + $0xc] sm:$0xf]
        %v1388 = vld [vmem:[%s1383 + $0x10] sm:$0xf]
        %v1389 = vld [vmem:[%s1383 + $0x14] sm:$0xf]
        %v1390 = vld [vmem:[%s1383 + $0x18] sm:$0xf]
        %v1391 = vld [vmem:[%s1383 + $0x1c] sm:$0xf]
        %v1392 = vld [vmem:[%s1383 + $0x20] sm:$0xf]
        %v1393 = vld [vmem:[%s1383 + $0x24] sm:$0xf]
        %v1394 = vld [vmem:[%s1383 + $0x28] sm:$0xf]
        %v1395 = vld [vmem:[%s1383 + $0x2c] sm:$0xf]
        %v1396 = vld [vmem:[%s1383 + $0x30] sm:$0xf]
        %v1397 = vld [vmem:[%s1383 + $0x34] sm:$0xf]
        %v1398 = vld [vmem:[%s1383 + $0x38] sm:$0xf]
        %v1399 = vld [vmem:[%s1383 + $0x3c] sm:$0xf]
        %v1400 = vld [vmem:[%s1383 + $0x40] sm:$0xf]
        %v1401 = vld [vmem:[%s1383 + $0x44] sm:$0xf]
        %v1402 = vld [vmem:[%s1383 + $0x48] sm:$0xf]
        %v1403 = vld [vmem:[%s1383 + $0x4c] sm:$0xf]
        %v1404 = vld [vmem:[%s1383 + $0x50] sm:$0xf]
        %v1405 = vld [vmem:[%s1383 + $0x54] sm:$0xf]
        %v1406 = vld [vmem:[%s1383 + $0x58] sm:$0xf]
        %v1407 = vld [vmem:[%s1383 + $0x5c] sm:$0xf]
        %v1408 = vld [vmem:[%s1383 + $0x60] sm:$0xf]
        %v1409 = vld [vmem:[%s1383 + $0x64] sm:$0xf]
        %v1410 = vld [vmem:[%s1383 + $0x68] sm:$0xf]
        %v1411 = vld [vmem:[%s1383 + $0x6c] sm:$0xf]
        %v1412 = vld [vmem:[%s1383 + $0x70] sm:$0xf]
        %v1413 = vld [vmem:[%s1383 + $0x74] sm:$0xf]
        %v1414 = vld [vmem:[%s1383 + $0x78] sm:$0xf]
        %v1415 = vld [vmem:[%s1383 + $0x7c] sm:$0xf]
        %v1416 = vld [vmem:[#allocation2] sm:$0xff]
        %v1417 = vld [vmem:[#allocation2 + $0x8] sm:$0xff]
        %v1418 = vld [vmem:[#allocation2 + $0x10] sm:$0xff]
        %v1419 = vld [vmem:[#allocation2 + $0x18] sm:$0xff]
        %v1420 = vld [vmem:[#allocation2 + $0x20] sm:$0xff]
        %v1421 = vld [vmem:[#allocation2 + $0x28] sm:$0xff]
        %v1422 = vld [vmem:[#allocation2 + $0x30] sm:$0xff]
        %v1423 = vld [vmem:[#allocation2 + $0x38] sm:$0xff]
        %v1424 = vld [vmem:[#allocation2 + $0x40] sm:$0xff]
        %v1425 = vld [vmem:[#allocation2 + $0x48] sm:$0xff]
        %v1426 = vld [vmem:[#allocation2 + $0x50] sm:$0xff]
        %v1427 = vld [vmem:[#allocation2 + $0x58] sm:$0xff]
        %v1428 = vld [vmem:[#allocation2 + $0x60] sm:$0xff]
        %v1429 = vld [vmem:[#allocation2 + $0x68] sm:$0xff]
        %v1430 = vld [vmem:[#allocation2 + $0x70] sm:$0xff]
        %v1431 = vld [vmem:[#allocation2 + $0x78] sm:$0xff]
        %v1432 = vld [vmem:[#allocation2 + $0x80] sm:$0xff]
        %v1433 = vld [vmem:[#allocation2 + $0x88] sm:$0xff]
        %v1434 = vld [vmem:[#allocation2 + $0x90] sm:$0xff]
        %v1435 = vld [vmem:[#allocation2 + $0x98] sm:$0xff]
        %v1436 = vld [vmem:[#allocation2 + $0xa0] sm:$0xff]
        %v1437 = vld [vmem:[#allocation2 + $0xa8] sm:$0xff]
        %v1438 = vld [vmem:[#allocation2 + $0xb0] sm:$0xff]
        %v1439 = vld [vmem:[#allocation2 + $0xb8] sm:$0xff]
        %v1440 = vld [vmem:[#allocation2 + $0xc0] sm:$0xff]
        %v1441 = vld [vmem:[#allocation2 + $0xc8] sm:$0xff]
        %v1442 = vld [vmem:[#allocation2 + $0xd0] sm:$0xff]
        %v1443 = vld [vmem:[#allocation2 + $0xd8] sm:$0xff]
        %v1444 = vld [vmem:[#allocation2 + $0xe0] sm:$0xff]
        %v1445 = vld [vmem:[#allocation2 + $0xe8] sm:$0xff]
        %v1446 = vld [vmem:[#allocation2 + $0xf0] sm:$0xff]
        %v1447 = vld [vmem:[#allocation2 + $0xf8] sm:$0xff]
        %v1448 = vpack.c.bf16 %v1417, %v1416
        %v1449 = vpack.c.bf16 %v1419, %v1418
        %v1450 = vpack.c.bf16 %v1421, %v1420
        %v1451 = vpack.c.bf16 %v1423, %v1422
        %v1452 = vpack.c.bf16 %v1425, %v1424
        %v1453 = vpack.c.bf16 %v1427, %v1426
        %v1454 = vpack.c.bf16 %v1429, %v1428
        %v1455 = vpack.c.bf16 %v1431, %v1430
        %v1456 = vpack.c.bf16 %v1433, %v1432
        %v1457 = vpack.c.bf16 %v1435, %v1434
        %v1458 = vpack.c.bf16 %v1437, %v1436
        %v1459 = vpack.c.bf16 %v1439, %v1438
        %v1460 = vpack.c.bf16 %v1441, %v1440
        %v1461 = vpack.c.bf16 %v1443, %v1442
        %v1462 = vpack.c.bf16 %v1445, %v1444
        %v1463 = vpack.c.bf16 %v1447, %v1446
        %v1464 = vld [vmem:[%s5] sm:$0xf]
        %v1465 = vld [vmem:[%s5 + $0x4] sm:$0xf]
        %v1466 = vld [vmem:[%s5 + $0x8] sm:$0xf]
        %v1467 = vld [vmem:[%s5 + $0xc] sm:$0xf]
        %v1468 = vld [vmem:[%s5 + $0x10] sm:$0xf]
        %v1469 = vld [vmem:[%s5 + $0x14] sm:$0xf]
        %v1470 = vld [vmem:[%s5 + $0x18] sm:$0xf]
        %v1471 = vld [vmem:[%s5 + $0x1c] sm:$0xf]
        %v1472 = vld [vmem:[%s5 + $0x20] sm:$0xf]
        %v1473 = vld [vmem:[%s5 + $0x24] sm:$0xf]
        %v1474 = vld [vmem:[%s5 + $0x28] sm:$0xf]
        %v1475 = vld [vmem:[%s5 + $0x2c] sm:$0xf]
        %v1476 = vld [vmem:[%s5 + $0x30] sm:$0xf]
        %v1477 = vld [vmem:[%s5 + $0x34] sm:$0xf]
        %v1478 = vld [vmem:[%s5 + $0x38] sm:$0xf]
        %v1479 = vld [vmem:[%s5 + $0x3c] sm:$0xf]
        %v1480 = vld [vmem:[%s5 + $0x40] sm:$0xf]
        %v1481 = vld [vmem:[%s5 + $0x44] sm:$0xf]
        %v1482 = vld [vmem:[%s5 + $0x48] sm:$0xf]
        %v1483 = vld [vmem:[%s5 + $0x4c] sm:$0xf]
        %v1484 = vld [vmem:[%s5 + $0x50] sm:$0xf]
        %v1485 = vld [vmem:[%s5 + $0x54] sm:$0xf]
        %v1486 = vld [vmem:[%s5 + $0x58] sm:$0xf]
        %v1487 = vld [vmem:[%s5 + $0x5c] sm:$0xf]
        %v1488 = vld [vmem:[%s5 + $0x60] sm:$0xf]
        %v1489 = vld [vmem:[%s5 + $0x64] sm:$0xf]
        %v1490 = vld [vmem:[%s5 + $0x68] sm:$0xf]
        %v1491 = vld [vmem:[%s5 + $0x6c] sm:$0xf]
        %v1492 = vld [vmem:[%s5 + $0x70] sm:$0xf]
        %v1493 = vld [vmem:[%s5 + $0x74] sm:$0xf]
        %v1494 = vld [vmem:[%s5 + $0x78] sm:$0xf]
        %v1495 = vld [vmem:[%s5 + $0x7c] sm:$0xf]
        %v1512 = vunpack.c.l.b16 %v1480
        %v1513 = vunpack.c.l.b16 %v1481
        %v1514 = vunpack.c.l.b16 %v1482
        %v1515 = vunpack.c.l.b16 %v1483
        %v1516 = vunpack.c.l.b16 %v1484
        %v1517 = vunpack.c.l.b16 %v1485
        %v1518 = vunpack.c.l.b16 %v1486
        %v1519 = vunpack.c.l.b16 %v1487
        %v1520 = vunpack.c.l.b16 %v1488
        %v1521 = vunpack.c.l.b16 %v1489
        %v1522 = vunpack.c.l.b16 %v1490
        %v1523 = vunpack.c.l.b16 %v1491
        %v1524 = vunpack.c.l.b16 %v1492
        %v1525 = vunpack.c.l.b16 %v1493
        %v1526 = vunpack.c.l.b16 %v1494
        %v1527 = vunpack.c.l.b16 %v1495
        %v1528 = vpack.c.b16 %v1513, %v1512
        %v1529 = vpack.c.b16 %v1515, %v1514
        %v1530 = vpack.c.b16 %v1517, %v1516
        %v1531 = vpack.c.b16 %v1519, %v1518
        %v1532 = vpack.c.b16 %v1521, %v1520
        %v1533 = vpack.c.b16 %v1523, %v1522
        %v1534 = vpack.c.b16 %v1525, %v1524
        %v1535 = vpack.c.b16 %v1527, %v1526
        %1544 = vmatprep.subr.bf16.mxu0 0
        %1545 = vmatpush1.bf16.msra.mxu0 %v1528
        %1546 = vmatprep.subr.bf16.mxu0 0
        %1547 = vmatpush1.bf16.msra.mxu0 %v1529
        %1548 = vmatprep.subr.bf16.mxu0 0
        %1549 = vmatpush1.bf16.msra.mxu0 %v1530
        %1550 = vmatprep.subr.bf16.mxu0 0
        %1551 = vmatpush1.bf16.msra.mxu0 %v1531
        %1552 = vmatprep.subr.bf16.mxu0 0
        %1553 = vmatpush1.bf16.msra.mxu0 %v1532
        %1554 = vmatprep.subr.bf16.mxu0 0
        %1555 = vmatpush1.bf16.msra.mxu0 %v1533
        %1556 = vmatprep.subr.bf16.mxu0 0
        %1557 = vmatpush1.bf16.msra.mxu0 %v1534
        %1558 = vmatprep.subr.bf16.mxu0 0
        %1559 = vmatpush1.bf16.msra.mxu0 %v1535
        %1560 = vmatprep.subr.bf16.mxu0 0
        %1561 = vmatpush1.bf16.msra.mxu0 0
        %1562 = vmatprep.subr.bf16.mxu0 0
        %1563 = vmatpush1.bf16.msra.mxu0 0
        %1564 = vmatprep.subr.bf16.mxu0 0
        %1565 = vmatpush1.bf16.msra.mxu0 0
        %1566 = vmatprep.subr.bf16.mxu0 0
        %1567 = vmatpush1.bf16.msra.mxu0 0
        %1568 = vmatprep.subr.bf16.mxu0 0
        %1569 = vmatpush1.bf16.msra.mxu0 0
        %1570 = vmatprep.subr.bf16.mxu0 0
        %1571 = vmatpush1.bf16.msra.mxu0 0
        %1572 = vmatprep.subr.bf16.mxu0 0
        %1573 = vmatpush1.bf16.msra.mxu0 0
        %1574 = vmatprep.subr.bf16.mxu0 0
        %1575 = vmatpush1.bf16.msra.mxu0 0
        %1576 = vmatprep.mubr.bf16.mxu0 0
        %1577 = vmatmul.mubr.bf16.gmra.mrb[0].mxu0 %v1448
        %v1578 = vpop.f32.mrb[0].mxu0
        %v1579 = vadd.f32 0.0, %v1578
        %v1580 = vpop.f32.mrb[0].mxu0
        %v1581 = vpop.f32.mrb[0].mxu0
        %v1582 = vadd.f32 0.0, %v1581
        %v1583 = vpop.f32.mrb[0].mxu0
        %1584 = vmatprep.mubr.bf16.mxu0 0
        %1585 = vmatmul.mubr.bf16.gmra.mrb[0].mxu0 %v1449
        %v1586 = vpop.f32.mrb[0].mxu0
        %v1587 = vadd.f32 0.0, %v1586
        %v1588 = vpop.f32.mrb[0].mxu0
        %v1589 = vpop.f32.mrb[0].mxu0
        %v1590 = vadd.f32 0.0, %v1589
        %v1591 = vpop.f32.mrb[0].mxu0
        %1592 = vmatprep.mubr.bf16.mxu0 0
        %1593 = vmatmul.mubr.bf16.gmra.mrb[0].mxu0 %v1450
        %v1594 = vpop.f32.mrb[0].mxu0
        %v1595 = vadd.f32 0.0, %v1594
        %v1596 = vpop.f32.mrb[0].mxu0
        %v1597 = vpop.f32.mrb[0].mxu0
        %v1598 = vadd.f32 0.0, %v1597
        %v1599 = vpop.f32.mrb[0].mxu0
        %1600 = vmatprep.mubr.bf16.mxu0 0
        %1601 = vmatmul.mubr.bf16.gmra.mrb[0].mxu0 %v1451
        %v1602 = vpop.f32.mrb[0].mxu0
        %v1603 = vadd.f32 0.0, %v1602
        %v1604 = vpop.f32.mrb[0].mxu0
        %v1605 = vpop.f32.mrb[0].mxu0
        %v1606 = vadd.f32 0.0, %v1605
        %v1607 = vpop.f32.mrb[0].mxu0
        %1608 = vmatprep.mubr.bf16.mxu0 0
        %1609 = vmatmul.mubr.bf16.gmra.mrb[0].mxu0 %v1452
        %v1610 = vpop.f32.mrb[0].mxu0
        %v1611 = vadd.f32 0.0, %v1610
        %v1612 = vpop.f32.mrb[0].mxu0
        %v1613 = vpop.f32.mrb[0].mxu0
        %v1614 = vadd.f32 0.0, %v1613
        %v1615 = vpop.f32.mrb[0].mxu0
        %1616 = vmatprep.mubr.bf16.mxu0 0
        %1617 = vmatmul.mubr.bf16.gmra.mrb[0].mxu0 %v1453
        %v1618 = vpop.f32.mrb[0].mxu0
        %v1619 = vadd.f32 0.0, %v1618
        %v1620 = vpop.f32.mrb[0].mxu0
        %v1621 = vpop.f32.mrb[0].mxu0
        %v1622 = vadd.f32 0.0, %v1621
        %v1623 = vpop.f32.mrb[0].mxu0
        %1624 = vmatprep.mubr.bf16.mxu0 0
        %1625 = vmatmul.mubr.bf16.gmra.mrb[0].mxu0 %v1454
        %v1626 = vpop.f32.mrb[0].mxu0
        %v1627 = vadd.f32 0.0, %v1626
        %v1628 = vpop.f32.mrb[0].mxu0
        %v1629 = vpop.f32.mrb[0].mxu0
        %v1630 = vadd.f32 0.0, %v1629
        %v1631 = vpop.f32.mrb[0].mxu0
        %1632 = vmatprep.mubr.bf16.mxu0 0
        %1633 = vmatmul.mubr.bf16.gmra.mrb[0].mxu0 %v1455
        %v1634 = vpop.f32.mrb[0].mxu0
        %v1635 = vadd.f32 0.0, %v1634
        %v1636 = vpop.f32.mrb[0].mxu0
        %v1637 = vpop.f32.mrb[0].mxu0
        %v1638 = vadd.f32 0.0, %v1637
        %v1639 = vpop.f32.mrb[0].mxu0
        %1640 = vmatprep.mubr.bf16.mxu0 0
        %1641 = vmatmul.mubr.bf16.gmra.mrb[0].mxu0 %v1456
        %v1642 = vpop.f32.mrb[0].mxu0
        %v1643 = vadd.f32 0.0, %v1642
        %v1644 = vpop.f32.mrb[0].mxu0
        %v1645 = vpop.f32.mrb[0].mxu0
        %v1646 = vadd.f32 0.0, %v1645
        %v1647 = vpop.f32.mrb[0].mxu0
        %1648 = vmatprep.mubr.bf16.mxu0 0
        %1649 = vmatmul.mubr.bf16.gmra.mrb[0].mxu0 %v1457
        %v1650 = vpop.f32.mrb[0].mxu0
        %v1651 = vadd.f32 0.0, %v1650
        %v1652 = vpop.f32.mrb[0].mxu0
        %v1653 = vpop.f32.mrb[0].mxu0
        %v1654 = vadd.f32 0.0, %v1653
        %v1655 = vpop.f32.mrb[0].mxu0
        %1656 = vmatprep.mubr.bf16.mxu0 0
        %1657 = vmatmul.mubr.bf16.gmra.mrb[0].mxu0 %v1458
        %v1658 = vpop.f32.mrb[0].mxu0
        %v1659 = vadd.f32 0.0, %v1658
        %v1660 = vpop.f32.mrb[0].mxu0
        %v1661 = vpop.f32.mrb[0].mxu0
        %v1662 = vadd.f32 0.0, %v1661
        %v1663 = vpop.f32.mrb[0].mxu0
        %1664 = vmatprep.mubr.bf16.mxu0 0
        %1665 = vmatmul.mubr.bf16.gmra.mrb[0].mxu0 %v1459
        %v1666 = vpop.f32.mrb[0].mxu0
        %v1667 = vadd.f32 0.0, %v1666
        %v1668 = vpop.f32.mrb[0].mxu0
        %v1669 = vpop.f32.mrb[0].mxu0
        %v1670 = vadd.f32 0.0, %v1669
        %v1671 = vpop.f32.mrb[0].mxu0
        %1672 = vmatprep.mubr.bf16.mxu0 0
        %1673 = vmatmul.mubr.bf16.gmra.mrb[0].mxu0 %v1460
        %v1674 = vpop.f32.mrb[0].mxu0
        %v1675 = vadd.f32 0.0, %v1674
        %v1676 = vpop.f32.mrb[0].mxu0
        %v1677 = vpop.f32.mrb[0].mxu0
        %v1678 = vadd.f32 0.0, %v1677
        %v1679 = vpop.f32.mrb[0].mxu0
        %1680 = vmatprep.mubr.bf16.mxu0 0
        %1681 = vmatmul.mubr.bf16.gmra.mrb[0].mxu0 %v1461
        %v1682 = vpop.f32.mrb[0].mxu0
        %v1683 = vadd.f32 0.0, %v1682
        %v1684 = vpop.f32.mrb[0].mxu0
        %v1685 = vpop.f32.mrb[0].mxu0
        %v1686 = vadd.f32 0.0, %v1685
        %v1687 = vpop.f32.mrb[0].mxu0
        %1688 = vmatprep.mubr.bf16.mxu0 0
        %1689 = vmatmul.mubr.bf16.gmra.mrb[0].mxu0 %v1462
        %v1690 = vpop.f32.mrb[0].mxu0
        %v1691 = vadd.f32 0.0, %v1690
        %v1692 = vpop.f32.mrb[0].mxu0
        %v1693 = vpop.f32.mrb[0].mxu0
        %v1694 = vadd.f32 0.0, %v1693
        %v1695 = vpop.f32.mrb[0].mxu0
        %1696 = vmatprep.mubr.bf16.mxu0 0
        %1697 = vmatmul.mubr.bf16.gmra.mrb[0].mxu0 %v1463
        %v1698 = vpop.f32.mrb[0].mxu0
        %v1699 = vadd.f32 0.0, %v1698
        %v1700 = vpop.f32.mrb[0].mxu0
        %v1701 = vpop.f32.mrb[0].mxu0
        %v1702 = vadd.f32 0.0, %v1701
        %v1703 = vpop.f32.mrb[0].mxu0
        %1704 = vdwg.mxu0
        %v1737 = vunpack.c.l.b16 %v1384
        %v1738 = vunpack.c.l.b16 %v1385
        %v1739 = vunpack.c.l.b16 %v1386
        %v1740 = vunpack.c.l.b16 %v1387
        %v1741 = vunpack.c.l.b16 %v1388
        %v1742 = vunpack.c.l.b16 %v1389
        %v1743 = vunpack.c.l.b16 %v1390
        %v1744 = vunpack.c.l.b16 %v1391
        %v1745 = vunpack.c.l.b16 %v1392
        %v1746 = vunpack.c.l.b16 %v1393
        %v1747 = vunpack.c.l.b16 %v1394
        %v1748 = vunpack.c.l.b16 %v1395
        %v1749 = vunpack.c.l.b16 %v1396
        %v1750 = vunpack.c.l.b16 %v1397
        %v1751 = vunpack.c.l.b16 %v1398
        %v1752 = vunpack.c.l.b16 %v1399
        %v1753 = vunpack.c.l.b16 %v1400
        %v1754 = vunpack.c.l.b16 %v1401
        %v1755 = vunpack.c.l.b16 %v1402
        %v1756 = vunpack.c.l.b16 %v1403
        %v1757 = vunpack.c.l.b16 %v1404
        %v1758 = vunpack.c.l.b16 %v1405
        %v1759 = vunpack.c.l.b16 %v1406
        %v1760 = vunpack.c.l.b16 %v1407
        %v1761 = vunpack.c.l.b16 %v1408
        %v1762 = vunpack.c.l.b16 %v1409
        %v1763 = vunpack.c.l.b16 %v1410
        %v1764 = vunpack.c.l.b16 %v1411
        %v1765 = vunpack.c.l.b16 %v1412
        %v1766 = vunpack.c.l.b16 %v1413
        %v1767 = vunpack.c.l.b16 %v1414
        %v1768 = vunpack.c.l.b16 %v1415
        %v1769 = vpack.c.b16 %v1738, %v1737
        %v1770 = vpack.c.b16 %v1740, %v1739
        %v1771 = vpack.c.b16 %v1742, %v1741
        %v1772 = vpack.c.b16 %v1744, %v1743
        %v1773 = vpack.c.b16 %v1746, %v1745
        %v1774 = vpack.c.b16 %v1748, %v1747
        %v1775 = vpack.c.b16 %v1750, %v1749
        %v1776 = vpack.c.b16 %v1752, %v1751
        %v1777 = vpack.c.b16 %v1754, %v1753
        %v1778 = vpack.c.b16 %v1756, %v1755
        %v1779 = vpack.c.b16 %v1758, %v1757
        %v1780 = vpack.c.b16 %v1760, %v1759
        %v1781 = vpack.c.b16 %v1762, %v1761
        %v1782 = vpack.c.b16 %v1764, %v1763
        %v1783 = vpack.c.b16 %v1766, %v1765
        %v1784 = vpack.c.b16 %v1768, %v1767
        %v1817 = vunpack.c.l.b16 %v1464
        %v1818 = vunpack.c.l.b16 %v1465
        %v1819 = vunpack.c.l.b16 %v1466
        %v1820 = vunpack.c.l.b16 %v1467
        %v1821 = vunpack.c.l.b16 %v1468
        %v1822 = vunpack.c.l.b16 %v1469
        %v1823 = vunpack.c.l.b16 %v1470
        %v1824 = vunpack.c.l.b16 %v1471
        %v1825 = vunpack.c.l.b16 %v1472
        %v1826 = vunpack.c.l.b16 %v1473
        %v1827 = vunpack.c.l.b16 %v1474
        %v1828 = vunpack.c.l.b16 %v1475
        %v1829 = vunpack.c.l.b16 %v1476
        %v1830 = vunpack.c.l.b16 %v1477
        %v1831 = vunpack.c.l.b16 %v1478
        %v1832 = vunpack.c.l.b16 %v1479
        %v1833 = vpack.c.b16 %v1818, %v1817
        %v1834 = vpack.c.b16 %v1820, %v1819
        %v1835 = vpack.c.b16 %v1822, %v1821
        %v1836 = vpack.c.b16 %v1824, %v1823
        %v1837 = vpack.c.b16 %v1826, %v1825
        %v1838 = vpack.c.b16 %v1828, %v1827
        %v1839 = vpack.c.b16 %v1830, %v1829
        %v1840 = vpack.c.b16 %v1832, %v1831
        %1849 = vmatprep.subr.bf16.mxu0 0
        %1850 = vmatpush1.bf16.msra.mxu0 %v1833
        %1851 = vmatprep.subr.bf16.mxu0 0
        %1852 = vmatpush1.bf16.msra.mxu0 %v1834
        %1853 = vmatprep.subr.bf16.mxu0 0
        %1854 = vmatpush1.bf16.msra.mxu0 %v1835
        %1855 = vmatprep.subr.bf16.mxu0 0
        %1856 = vmatpush1.bf16.msra.mxu0 %v1836
        %1857 = vmatprep.subr.bf16.mxu0 0
        %1858 = vmatpush1.bf16.msra.mxu0 %v1837
        %1859 = vmatprep.subr.bf16.mxu0 0
        %1860 = vmatpush1.bf16.msra.mxu0 %v1838
        %1861 = vmatprep.subr.bf16.mxu0 0
        %1862 = vmatpush1.bf16.msra.mxu0 %v1839
        %1863 = vmatprep.subr.bf16.mxu0 0
        %1864 = vmatpush1.bf16.msra.mxu0 %v1840
        %1865 = vmatprep.subr.bf16.mxu0 0
        %1866 = vmatpush1.bf16.msra.mxu0 0
        %1867 = vmatprep.subr.bf16.mxu0 0
        %1868 = vmatpush1.bf16.msra.mxu0 0
        %1869 = vmatprep.subr.bf16.mxu0 0
        %1870 = vmatpush1.bf16.msra.mxu0 0
        %1871 = vmatprep.subr.bf16.mxu0 0
        %1872 = vmatpush1.bf16.msra.mxu0 0
        %1873 = vmatprep.subr.bf16.mxu0 0
        %1874 = vmatpush1.bf16.msra.mxu0 0
        %1875 = vmatprep.subr.bf16.mxu0 0
        %1876 = vmatpush1.bf16.msra.mxu0 0
        %1877 = vmatprep.subr.bf16.mxu0 0
        %1878 = vmatpush1.bf16.msra.mxu0 0
        %1879 = vmatprep.subr.bf16.mxu0 0
        %1880 = vmatpush1.bf16.msra.mxu0 0
        %1881 = vmatprep.mubr.bf16.mxu0 0
        %1882 = vmatmul.mubr.bf16.gmra.mrb[0].mxu0 %v1769
        %v1883 = vpop.f32.mrb[0].mxu0
        %v1884 = vadd.f32 %v1579, %v1883
        %v1885 = vpop.f32.mrb[0].mxu0
        %v1886 = vpop.f32.mrb[0].mxu0
        %v1887 = vadd.f32 %v1582, %v1886
        %v1888 = vpop.f32.mrb[0].mxu0
        %1889 = vmatprep.mubr.bf16.mxu0 0
        %1890 = vmatmul.mubr.bf16.gmra.mrb[0].mxu0 %v1770
        %v1891 = vpop.f32.mrb[0].mxu0
        %v1892 = vadd.f32 %v1587, %v1891
        %v1893 = vpop.f32.mrb[0].mxu0
        %v1894 = vpop.f32.mrb[0].mxu0
        %v1895 = vadd.f32 %v1590, %v1894
        %v1896 = vpop.f32.mrb[0].mxu0
        %1897 = vmatprep.mubr.bf16.mxu0 0
        %1898 = vmatmul.mubr.bf16.gmra.mrb[0].mxu0 %v1771
        %v1899 = vpop.f32.mrb[0].mxu0
        %v1900 = vadd.f32 %v1595, %v1899
        %v1901 = vpop.f32.mrb[0].mxu0
        %v1902 = vpop.f32.mrb[0].mxu0
        %v1903 = vadd.f32 %v1598, %v1902
        %v1904 = vpop.f32.mrb[0].mxu0
        %1905 = vmatprep.mubr.bf16.mxu0 0
        %1906 = vmatmul.mubr.bf16.gmra.mrb[0].mxu0 %v1772
        %v1907 = vpop.f32.mrb[0].mxu0
        %v1908 = vadd.f32 %v1603, %v1907
        %v1909 = vpop.f32.mrb[0].mxu0
        %v1910 = vpop.f32.mrb[0].mxu0
        %v1911 = vadd.f32 %v1606, %v1910
        %v1912 = vpop.f32.mrb[0].mxu0
        %1913 = vmatprep.mubr.bf16.mxu0 0
        %1914 = vmatmul.mubr.bf16.gmra.mrb[0].mxu0 %v1773
        %v1915 = vpop.f32.mrb[0].mxu0
        %v1916 = vadd.f32 %v1611, %v1915
        %v1917 = vpop.f32.mrb[0].mxu0
        %v1918 = vpop.f32.mrb[0].mxu0
        %v1919 = vadd.f32 %v1614, %v1918
        %v1920 = vpop.f32.mrb[0].mxu0
        %1921 = vmatprep.mubr.bf16.mxu0 0
        %1922 = vmatmul.mubr.bf16.gmra.mrb[0].mxu0 %v1774
        %v1923 = vpop.f32.mrb[0].mxu0
        %v1924 = vadd.f32 %v1619, %v1923
        %v1925 = vpop.f32.mrb[0].mxu0
        %v1926 = vpop.f32.mrb[0].mxu0
        %v1927 = vadd.f32 %v1622, %v1926
        %v1928 = vpop.f32.mrb[0].mxu0
        %1929 = vmatprep.mubr.bf16.mxu0 0
        %1930 = vmatmul.mubr.bf16.gmra.mrb[0].mxu0 %v1775
        %v1931 = vpop.f32.mrb[0].mxu0
        %v1932 = vadd.f32 %v1627, %v1931
        %v1933 = vpop.f32.mrb[0].mxu0
        %v1934 = vpop.f32.mrb[0].mxu0
        %v1935 = vadd.f32 %v1630, %v1934
        %v1936 = vpop.f32.mrb[0].mxu0
        %1937 = vmatprep.mubr.bf16.mxu0 0
        %1938 = vmatmul.mubr.bf16.gmra.mrb[0].mxu0 %v1776
        %v1939 = vpop.f32.mrb[0].mxu0
        %v1940 = vadd.f32 %v1635, %v1939
        %v1941 = vpop.f32.mrb[0].mxu0
        %v1942 = vpop.f32.mrb[0].mxu0
        %v1943 = vadd.f32 %v1638, %v1942
        %v1944 = vpop.f32.mrb[0].mxu0
        %1945 = vmatprep.mubr.bf16.mxu0 0
        %1946 = vmatmul.mubr.bf16.gmra.mrb[0].mxu0 %v1777
        %v1947 = vpop.f32.mrb[0].mxu0
        %v1948 = vadd.f32 %v1643, %v1947
        %v1949 = vpop.f32.mrb[0].mxu0
        %v1950 = vpop.f32.mrb[0].mxu0
        %v1951 = vadd.f32 %v1646, %v1950
        %v1952 = vpop.f32.mrb[0].mxu0
        %1953 = vmatprep.mubr.bf16.mxu0 0
        %1954 = vmatmul.mubr.bf16.gmra.mrb[0].mxu0 %v1778
        %v1955 = vpop.f32.mrb[0].mxu0
        %v1956 = vadd.f32 %v1651, %v1955
        %v1957 = vpop.f32.mrb[0].mxu0
        %v1958 = vpop.f32.mrb[0].mxu0
        %v1959 = vadd.f32 %v1654, %v1958
        %v1960 = vpop.f32.mrb[0].mxu0
        %1961 = vmatprep.mubr.bf16.mxu0 0
        %1962 = vmatmul.mubr.bf16.gmra.mrb[0].mxu0 %v1779
        %v1963 = vpop.f32.mrb[0].mxu0
        %v1964 = vadd.f32 %v1659, %v1963
        %v1965 = vpop.f32.mrb[0].mxu0
        %v1966 = vpop.f32.mrb[0].mxu0
        %v1967 = vadd.f32 %v1662, %v1966
        %v1968 = vpop.f32.mrb[0].mxu0
        %1969 = vmatprep.mubr.bf16.mxu0 0
        %1970 = vmatmul.mubr.bf16.gmra.mrb[0].mxu0 %v1780
        %v1971 = vpop.f32.mrb[0].mxu0
        %v1972 = vadd.f32 %v1667, %v1971
        %v1973 = vpop.f32.mrb[0].mxu0
        %v1974 = vpop.f32.mrb[0].mxu0
        %v1975 = vadd.f32 %v1670, %v1974
        %v1976 = vpop.f32.mrb[0].mxu0
        %1977 = vmatprep.mubr.bf16.mxu0 0
        %1978 = vmatmul.mubr.bf16.gmra.mrb[0].mxu0 %v1781
        %v1979 = vpop.f32.mrb[0].mxu0
        %v1980 = vadd.f32 %v1675, %v1979
        %v1981 = vpop.f32.mrb[0].mxu0
        %v1982 = vpop.f32.mrb[0].mxu0
        %v1983 = vadd.f32 %v1678, %v1982
        %v1984 = vpop.f32.mrb[0].mxu0
        %1985 = vmatprep.mubr.bf16.mxu0 0
        %1986 = vmatmul.mubr.bf16.gmra.mrb[0].mxu0 %v1782
        %v1987 = vpop.f32.mrb[0].mxu0
        %v1988 = vadd.f32 %v1683, %v1987
        %v1989 = vpop.f32.mrb[0].mxu0
        %v1990 = vpop.f32.mrb[0].mxu0
        %v1991 = vadd.f32 %v1686, %v1990
        %v1992 = vpop.f32.mrb[0].mxu0
        %1993 = vmatprep.mubr.bf16.mxu0 0
        %1994 = vmatmul.mubr.bf16.gmra.mrb[0].mxu0 %v1783
        %v1995 = vpop.f32.mrb[0].mxu0
        %v1996 = vadd.f32 %v1691, %v1995
        %v1997 = vpop.f32.mrb[0].mxu0
        %v1998 = vpop.f32.mrb[0].mxu0
        %v1999 = vadd.f32 %v1694, %v1998
        %v2000 = vpop.f32.mrb[0].mxu0
        %2001 = vmatprep.mubr.bf16.mxu0 0
        %2002 = vmatmul.mubr.bf16.gmra.mrb[0].mxu0 %v1784
        %v2003 = vpop.f32.mrb[0].mxu0
        %v2004 = vadd.f32 %v1699, %v2003
        %v2005 = vpop.f32.mrb[0].mxu0
        %v2006 = vpop.f32.mrb[0].mxu0
        %v2007 = vadd.f32 %v1702, %v2006
        %v2008 = vpop.f32.mrb[0].mxu0
        %2009 = vdwg.mxu0
        %v2010 = vld [vmem:[%s6] sm:$0x1]
        %v2012 = vlaneseq
        %v2013 = vshrl.u32 %v2012, 7
        %v2014 = vsub.s32 0, %v2013
        %v2015 = vrot.slane %v2010, %v2014
        %v2017 = vadd.f32 %v1884, %v2015
        %v2018 = vadd.f32 %v1887, %v2015
        %v2019 = vadd.f32 %v1892, %v2015
        %v2020 = vadd.f32 %v1895, %v2015
        %v2021 = vadd.f32 %v1900, %v2015
        %v2022 = vadd.f32 %v1903, %v2015
        %v2023 = vadd.f32 %v1908, %v2015
        %v2024 = vadd.f32 %v1911, %v2015
        %v2025 = vadd.f32 %v1916, %v2015
        %v2026 = vadd.f32 %v1919, %v2015
        %v2027 = vadd.f32 %v1924, %v2015
        %v2028 = vadd.f32 %v1927, %v2015
        %v2029 = vadd.f32 %v1932, %v2015
        %v2030 = vadd.f32 %v1935, %v2015
        %v2031 = vadd.f32 %v1940, %v2015
        %v2032 = vadd.f32 %v1943, %v2015
        %v2033 = vadd.f32 %v1948, %v2015
        %v2034 = vadd.f32 %v1951, %v2015
        %v2035 = vadd.f32 %v1956, %v2015
        %v2036 = vadd.f32 %v1959, %v2015
        %v2037 = vadd.f32 %v1964, %v2015
        %v2038 = vadd.f32 %v1967, %v2015
        %v2039 = vadd.f32 %v1972, %v2015
        %v2040 = vadd.f32 %v1975, %v2015
        %v2041 = vadd.f32 %v1980, %v2015
        %v2042 = vadd.f32 %v1983, %v2015
        %v2043 = vadd.f32 %v1988, %v2015
        %v2044 = vadd.f32 %v1991, %v2015
        %v2045 = vadd.f32 %v1996, %v2015
        %v2046 = vadd.f32 %v1999, %v2015
        %v2047 = vadd.f32 %v2004, %v2015
        %v2048 = vadd.f32 %v2007, %v2015
        %vm2049 = vcmp.gt.f32.partialorder %v2017, 0.0
        %vm2050 = vcmp.gt.f32.partialorder %v2018, 0.0
        %vm2051 = vcmp.gt.f32.partialorder %v2019, 0.0
        %vm2052 = vcmp.gt.f32.partialorder %v2020, 0.0
        %vm2053 = vcmp.gt.f32.partialorder %v2021, 0.0
        %vm2054 = vcmp.gt.f32.partialorder %v2022, 0.0
        %vm2055 = vcmp.gt.f32.partialorder %v2023, 0.0
        %vm2056 = vcmp.gt.f32.partialorder %v2024, 0.0
        %vm2057 = vcmp.gt.f32.partialorder %v2025, 0.0
        %vm2058 = vcmp.gt.f32.partialorder %v2026, 0.0
        %vm2059 = vcmp.gt.f32.partialorder %v2027, 0.0
        %vm2060 = vcmp.gt.f32.partialorder %v2028, 0.0
        %vm2061 = vcmp.gt.f32.partialorder %v2029, 0.0
        %vm2062 = vcmp.gt.f32.partialorder %v2030, 0.0
        %vm2063 = vcmp.gt.f32.partialorder %v2031, 0.0
        %vm2064 = vcmp.gt.f32.partialorder %v2032, 0.0
        %vm2065 = vcmp.gt.f32.partialorder %v2033, 0.0
        %vm2066 = vcmp.gt.f32.partialorder %v2034, 0.0
        %vm2067 = vcmp.gt.f32.partialorder %v2035, 0.0
        %vm2068 = vcmp.gt.f32.partialorder %v2036, 0.0
        %vm2069 = vcmp.gt.f32.partialorder %v2037, 0.0
        %vm2070 = vcmp.gt.f32.partialorder %v2038, 0.0
        %vm2071 = vcmp.gt.f32.partialorder %v2039, 0.0
        %vm2072 = vcmp.gt.f32.partialorder %v2040, 0.0
        %vm2073 = vcmp.gt.f32.partialorder %v2041, 0.0
        %vm2074 = vcmp.gt.f32.partialorder %v2042, 0.0
        %vm2075 = vcmp.gt.f32.partialorder %v2043, 0.0
        %vm2076 = vcmp.gt.f32.partialorder %v2044, 0.0
        %vm2077 = vcmp.gt.f32.partialorder %v2045, 0.0
        %vm2078 = vcmp.gt.f32.partialorder %v2046, 0.0
        %vm2079 = vcmp.gt.f32.partialorder %v2047, 0.0
        %vm2080 = vcmp.gt.f32.partialorder %v2048, 0.0
        %v2081 = vmul.f32 %v2017, 0.01
        %v2082 = vmul.f32 %v2018, 0.01
        %v2083 = vmul.f32 %v2019, 0.01
        %v2084 = vmul.f32 %v2020, 0.01
        %v2085 = vmul.f32 %v2021, 0.01
        %v2086 = vmul.f32 %v2022, 0.01
        %v2087 = vmul.f32 %v2023, 0.01
        %v2088 = vmul.f32 %v2024, 0.01
        %v2089 = vmul.f32 %v2025, 0.01
        %v2090 = vmul.f32 %v2026, 0.01
        %v2091 = vmul.f32 %v2027, 0.01
        %v2092 = vmul.f32 %v2028, 0.01
        %v2093 = vmul.f32 %v2029, 0.01
        %v2094 = vmul.f32 %v2030, 0.01
        %v2095 = vmul.f32 %v2031, 0.01
        %v2096 = vmul.f32 %v2032, 0.01
        %v2097 = vmul.f32 %v2033, 0.01
        %v2098 = vmul.f32 %v2034, 0.01
        %v2099 = vmul.f32 %v2035, 0.01
        %v2100 = vmul.f32 %v2036, 0.01
        %v2101 = vmul.f32 %v2037, 0.01
        %v2102 = vmul.f32 %v2038, 0.01
        %v2103 = vmul.f32 %v2039, 0.01
        %v2104 = vmul.f32 %v2040, 0.01
        %v2105 = vmul.f32 %v2041, 0.01
        %v2106 = vmul.f32 %v2042, 0.01
        %v2107 = vmul.f32 %v2043, 0.01
        %v2108 = vmul.f32 %v2044, 0.01
        %v2109 = vmul.f32 %v2045, 0.01
        %v2110 = vmul.f32 %v2046, 0.01
        %v2111 = vmul.f32 %v2047, 0.01
        %v2112 = vmul.f32 %v2048, 0.01
        %v2113 = vsel %vm2049, %v2017, %v2081
        %v2114 = vsel %vm2050, %v2018, %v2082
        %v2115 = vsel %vm2051, %v2019, %v2083
        %v2116 = vsel %vm2052, %v2020, %v2084
        %v2117 = vsel %vm2053, %v2021, %v2085
        %v2118 = vsel %vm2054, %v2022, %v2086
        %v2119 = vsel %vm2055, %v2023, %v2087
        %v2120 = vsel %vm2056, %v2024, %v2088
        %v2121 = vsel %vm2057, %v2025, %v2089
        %v2122 = vsel %vm2058, %v2026, %v2090
        %v2123 = vsel %vm2059, %v2027, %v2091
        %v2124 = vsel %vm2060, %v2028, %v2092
        %v2125 = vsel %vm2061, %v2029, %v2093
        %v2126 = vsel %vm2062, %v2030, %v2094
        %v2127 = vsel %vm2063, %v2031, %v2095
        %v2128 = vsel %vm2064, %v2032, %v2096
        %v2129 = vsel %vm2065, %v2033, %v2097
        %v2130 = vsel %vm2066, %v2034, %v2098
        %v2131 = vsel %vm2067, %v2035, %v2099
        %v2132 = vsel %vm2068, %v2036, %v2100
        %v2133 = vsel %vm2069, %v2037, %v2101
        %v2134 = vsel %vm2070, %v2038, %v2102
        %v2135 = vsel %vm2071, %v2039, %v2103
        %v2136 = vsel %vm2072, %v2040, %v2104
        %v2137 = vsel %vm2073, %v2041, %v2105
        %v2138 = vsel %vm2074, %v2042, %v2106
        %v2139 = vsel %vm2075, %v2043, %v2107
        %v2140 = vsel %vm2076, %v2044, %v2108
        %v2141 = vsel %vm2077, %v2045, %v2109
        %v2142 = vsel %vm2078, %v2046, %v2110
        %v2143 = vsel %vm2079, %v2047, %v2111
        %v2144 = vsel %vm2080, %v2048, %v2112
        %2145 = vst [vmem:[%s268] sm:$0xff] %v2113
        %2146 = vst [vmem:[%s268 + $0x8] sm:$0xff] %v2114
        %2147 = vst [vmem:[%s268 + $0x10] sm:$0xff] %v2115
        %2148 = vst [vmem:[%s268 + $0x18] sm:$0xff] %v2116
        %2149 = vst [vmem:[%s268 + $0x20] sm:$0xff] %v2117
        %2150 = vst [vmem:[%s268 + $0x28] sm:$0xff] %v2118
        %2151 = vst [vmem:[%s268 + $0x30] sm:$0xff] %v2119
        %2152 = vst [vmem:[%s268 + $0x38] sm:$0xff] %v2120
        %2153 = vst [vmem:[%s268 + $0x40] sm:$0xff] %v2121
        %2154 = vst [vmem:[%s268 + $0x48] sm:$0xff] %v2122
        %2155 = vst [vmem:[%s268 + $0x50] sm:$0xff] %v2123
        %2156 = vst [vmem:[%s268 + $0x58] sm:$0xff] %v2124
        %2157 = vst [vmem:[%s268 + $0x60] sm:$0xff] %v2125
        %2158 = vst [vmem:[%s268 + $0x68] sm:$0xff] %v2126
        %2159 = vst [vmem:[%s268 + $0x70] sm:$0xff] %v2127
        %2160 = vst [vmem:[%s268 + $0x78] sm:$0xff] %v2128
        %2161 = vst [vmem:[%s268 + $0x80] sm:$0xff] %v2129
        %2162 = vst [vmem:[%s268 + $0x88] sm:$0xff] %v2130
        %2163 = vst [vmem:[%s268 + $0x90] sm:$0xff] %v2131
        %2164 = vst [vmem:[%s268 + $0x98] sm:$0xff] %v2132
        %2165 = vst [vmem:[%s268 + $0xa0] sm:$0xff] %v2133
        %2166 = vst [vmem:[%s268 + $0xa8] sm:$0xff] %v2134
        %2167 = vst [vmem:[%s268 + $0xb0] sm:$0xff] %v2135
        %2168 = vst [vmem:[%s268 + $0xb8] sm:$0xff] %v2136
        %2169 = vst [vmem:[%s268 + $0xc0] sm:$0xff] %v2137
        %2170 = vst [vmem:[%s268 + $0xc8] sm:$0xff] %v2138
        %2171 = vst [vmem:[%s268 + $0xd0] sm:$0xff] %v2139
        %2172 = vst [vmem:[%s268 + $0xd8] sm:$0xff] %v2140
        %2173 = vst [vmem:[%s268 + $0xe0] sm:$0xff] %v2141
        %2174 = vst [vmem:[%s268 + $0xe8] sm:$0xff] %v2142
        %2175 = vst [vmem:[%s268 + $0xf0] sm:$0xff] %v2143
        %2176 = vst [vmem:[%s268 + $0xf8] sm:$0xff] %v2144
      $region48: #{gcn_unit_forward.1} parent=35 // pred_fallthru
        _
      %s2177 = smul.u32 32, %s36
      %p2178 = scmp.lt.s32.totalorder %s2177, 63
      %s2179 = scalar_select %p2178, %s2177, 63
      %s2180 = smul.addr %s2179, 8
      %s2181 = scalar_lea.vmem %s7, %s2180
      // Predicated region
      $region49: #{gcn_unit_forward.1} parent=35 // pred_check
        %p2182 = pneg %p159
      $region50: #{gcn_unit_forward.1} parent=35 // pred_check_branch
        %2184 = sbr.rel (%p2182) target = $region52
      $region51: #{gcn_unit_forward.1} parent=35 // pred_region
        %s2185 = smul.u32 32, %s36
      $region52: #{gcn_unit_forward.1} parent=35 // pred_fallthru
        _
    $region36: #{gcn_unit_forward.1} parent=5 // pred_fallthru
      _
    %p2186 = scmp.le.s32.totalorder 2, %s27
    // Predicated region
    $region53: #{gcn_unit_forward.1} parent=5 // pred_check
      %p2187 = pneg %p2186
    $region54: #{gcn_unit_forward.1} parent=5 // pred_check_branch
      %2189 = sbr.rel (%p2187) target = $region56
    $region55: #{gcn_unit_forward.1} parent=5 // pred_region
      %s2190 = ssub.s32 %s27, 2
      // Predicated region
      $region57: #{gcn_unit_forward.1} parent=55 // pred_check
        %p2191 = pneg %p165
      $region58: #{gcn_unit_forward.1} parent=55 // pred_check_branch
        %2193 = sbr.rel (%p2191) target = $region60
      $region59: #{gcn_unit_forward.1} parent=55 // pred_region
        %s2194 = smul.u32 32, %s38
        %p2195 = scmp.lt.s32.totalorder %s2194, 63
        %s2196 = scalar_select %p2195, %s2194, 63
        %s2197 = smul.addr %s2196, 8
        %s2198 = scalar_lea.vmem %s7, %s2197
      $region60: #{gcn_unit_forward.1} parent=55 // pred_fallthru
        _
    $region56: #{gcn_unit_forward.1} parent=5 // pred_fallthru
      _
  $region6: #{gcn_unit_forward.1} parent=0 // loop_footer
    %s31 = sadd.s32 1, %s27
  $region7: #{gcn_unit_forward.1} parent=0 // loop_footer_branch
    %26 = sbr.rel target = $region3
  $region8: #{gcn_unit_forward.1} parent=0 // loop_exit
    _

</llo_original>
